<compile_context>
chip_gen: v6e
topology: v6e:2x2x1
jax: 0.10.0
libtpu: 0.0.40
codegen_flags: <defaults>
</compile_context>

<pallas_src>
import functools

import jax
import jax.numpy as jnp
from jax.experimental import pallas as pl
from jax.experimental.pallas import tpu as pltpu


_GP = 128            # lane-padded width of each LSTM gate
_GW = 4 * _GP        # padded width of the whole [i|f|g|o] gate row


def _round_up(n, m):
    return ((n + m - 1) // m) * m


def lstm_kernel(x_ref, big_ref, small_ref, out_ref, *,
                input_size, hidden_size, num_classes):
    """Full LSTM recurrence + final linear layer for one sequence.

    x_ref     : (S, I)                 input sequence
    big_ref   : (Ipad+Hpad+8, 4*128)   packed [W_ih^T | W_hh^T | bias], gate-lane padded,
                                       g-gate columns pre-scaled by 2
    small_ref : (8+Hpad, 128)          packed [h0 | c0 | b_fc | W_fc^T]
    out_ref   : (1, C)                 output
    """
    S = x_ref.shape[0]
    ipad = _round_up(input_size, 8)
    hpad = _round_up(hidden_size, 8)

    # ---- one-time loads, all hoisted out of the recurrence ------------------
    wih = big_ref[0:input_size, :]                     # (I,    4*128)
    whh = big_ref[ipad:ipad + hpad, :]                 # (Hpad, 4*128) zero-padded rows
    b = big_ref[ipad + hpad:ipad + hpad + 1, :]        # (1,    4*128)

    h = small_ref[0:1, :]                              # (1, 128), lanes >= H are 0
    c = small_ref[1:2, :]                              # (1, 128)

    # Non-recurrent gate pre-activations for all timesteps in one MXU matmul,
    # bias folded in once.  Stays in vregs (S x 4*128 = 4 vregs).
    gx = (jnp.dot(x_ref[...], wih, preferred_element_type=jnp.float32)
          + b)                                          # (S, 4*128)

    # ---- recurrence: fully unrolled, everything in vregs --------------------
    for t in range(S):
        gates = gx[t:t + 1, :] + jnp.dot(
            h[:, 0:hpad], whh, preferred_element_type=jnp.float32)  # (1, 4*128)
        sig = jax.nn.sigmoid(gates)            # single full-row EUP pass
        i_g = sig[:, 0 * _GP:1 * _GP]          # lane-aligned whole-vreg picks
        f_g = sig[:, 1 * _GP:2 * _GP]
        g_g = 2.0 * sig[:, 2 * _GP:3 * _GP] - 1.0   # tanh(z) = 2*sigmoid(2z) - 1
        o_g = sig[:, 3 * _GP:4 * _GP]
        c = f_g * c + i_g * g_g
        h = o_g * jnp.tanh(c)

    # ---- final linear layer: h @ W_fc^T + b_fc -------------------------------
    # TODO(synk): nn.Dropout is identity in eval mode; training-mode dropout
    # (scaled Bernoulli mask) is not implemented here.
    wfc = small_ref[8:8 + hpad, 0:num_classes]          # (Hpad, C)
    bfc = small_ref[2:3, 0:num_classes]                 # (1, C)
    out_ref[...] = (jnp.dot(h[:, 0:hpad], wfc,
                            preferred_element_type=jnp.float32) + bfc)


def prepare_params(params):
    """One-time (model-load) prep.

    Transposes the weights, lane-pads each gate to its own 128-lane block,
    folds b_ih + b_hh, pre-scales the g gate by 2 (for the tanh->sigmoid
    identity), and packs everything into two VMEM blobs so the kernel sees
    only 3 input DMAs.
    """
    H4, I = params["w_ih"].shape         # (4H, I)
    H = H4 // 4
    C = params["w_fc"].shape[0]          # (C, H)
    assert params["h_0"].shape[0] == 1 and params["c_0"].shape[0] == 1, (
        "kernel implements num_layers=1 only")
    assert params["h_0"].shape[1] == 1, "module hard-codes batch_size=1"
    assert H <= _GP and C <= _GP

    ipad = _round_up(I, 8)
    hpad = _round_up(H, 8)

    # Per-gate scale in PyTorch gate order [i, f, g, o]; g pre-scaled by 2 so
    # that tanh(z_g) == 2*sigmoid(2*z_g) - 1 needs only the row sigmoid.
    g_scale = jnp.array([1.0, 1.0, 2.0, 1.0], jnp.float32)

    def gates_t_padded(w):               # (4H, X) -> (X, 4*_GP)
        X = w.shape[1]
        wt = w.T.reshape(X, 4, H).astype(jnp.float32) * g_scale[None, :, None]
        wt = jnp.pad(wt, ((0, 0), (0, 0), (0, _GP - H)))
        return wt.reshape(X, _GW)

    wih_p = gates_t_padded(params["w_ih"])                       # (I, 4*128)
    whh_p = gates_t_padded(params["w_hh"])                       # (H, 4*128)
    b = (params["b_ih"] + params["b_hh"]).reshape(4, H).astype(jnp.float32)
    b = b * g_scale[:, None]
    b_p = jnp.pad(b, ((0, 0), (0, _GP - H))).reshape(_GW)        # (4*128,)

    big = jnp.zeros((ipad + hpad + 8, _GW), jnp.float32)
    big = big.at[0:I, :].set(wih_p)
    big = big.at[ipad:ipad + H, :].set(whh_p)                    # rows H..hpad stay 0
    big = big.at[ipad + hpad, :].set(b_p)

    small = jnp.zeros((8 + hpad, _GP), jnp.float32)
    small = small.at[0, :H].set(params["h_0"].reshape(H).astype(jnp.float32))
    small = small.at[1, :H].set(params["c_0"].reshape(H).astype(jnp.float32))
    small = small.at[2, :C].set(params["b_fc"].astype(jnp.float32))
    small = small.at[8:8 + H, :C].set(params["w_fc"].T.astype(jnp.float32))

    return {"big": big, "small": small,
            "input_size": I, "hidden_size": H, "num_classes": C}


def lstm_forward(x, prep):
    """x: (1, S, input_size) float32  ->  (1, num_classes) float32."""
    assert x.shape[0] == 1, "module hard-codes batch_size=1 via h_0/c_0"
    assert x.shape[2] == prep["input_size"]
    C = prep["num_classes"]

    kernel = functools.partial(
        lstm_kernel,
        input_size=prep["input_size"],
        hidden_size=prep["hidden_size"],
        num_classes=C,
    )
    vmem = pl.BlockSpec(memory_space=pltpu.MemorySpace.VMEM)
    return pl.pallas_call(
        kernel,
        out_shape=jax.ShapeDtypeStruct((1, C), jnp.float32),
        in_specs=[vmem, vmem, vmem],
        out_specs=vmem,
    )(x[0], prep["big"], prep["small"])


def lstm_reference(x, params):
    """Pure-JAX reference matching PyTorch nn.LSTM semantics (eval mode)."""
    H = params["w_hh"].shape[1]
    x_s = x[0]
    h = params["h_0"].reshape(1, H)
    c = params["c_0"].reshape(1, H)
    b = (params["b_ih"] + params["b_hh"]).reshape(1, 4 * H)

    def step(carry, x_t):
        h, c = carry
        gates = x_t[None, :] @ params["w_ih"].T + h @ params["w_hh"].T + b
        i = jax.nn.sigmoid(gates[:, 0 * H:1 * H])
        f = jax.nn.sigmoid(gates[:, 1 * H:2 * H])
        g = jnp.tanh(gates[:, 2 * H:3 * H])
        o = jax.nn.sigmoid(gates[:, 3 * H:4 * H])
        c = f * c + i * g
        h = o * jnp.tanh(c)
        return (h, c), None

    (h, c), _ = jax.lax.scan(step, (h, c), x_s)
    return h @ params["w_fc"].T + params["b_fc"].reshape(1, -1)


if __name__ == "__main__":
    input_size, hidden_size, num_classes = 20, 14, 1
    seq_len, batch = 8, 1
    H4 = 4 * hidden_size

    key = jax.random.PRNGKey(0)
    ks = jax.random.split(key, 9)
    params = {
        "w_ih": 0.2 * jax.random.normal(ks[0], (H4, input_size), jnp.float32),
        "w_hh": 0.2 * jax.random.normal(ks[1], (H4, hidden_size), jnp.float32),
        "b_ih": 0.1 * jax.random.normal(ks[2], (H4,), jnp.float32),
        "b_hh": 0.1 * jax.random.normal(ks[3], (H4,), jnp.float32),
        "h_0":  jax.random.normal(ks[4], (1, batch, hidden_size), jnp.float32),
        "c_0":  jax.random.normal(ks[5], (1, batch, hidden_size), jnp.float32),
        "w_fc": jax.random.normal(ks[6], (num_classes, hidden_size), jnp.float32),
        "b_fc": 0.1 * jax.random.normal(ks[7], (num_classes,), jnp.float32),
    }
    x = jax.random.normal(ks[8], (batch, seq_len, input_size), jnp.float32)

    prep = prepare_params(params)          # one-time model-load prep
    out = jax.block_until_ready(lstm_forward(x, prep))

    ref = lstm_reference(x, params)
    assert out.shape == (1, num_classes), out.shape
    # Slightly looser than 1e-4: tanh is computed via 2*sigmoid(2x)-1 in the
    # kernel, which changes rounding at the ~1e-6 level.
    assert jnp.allclose(out, ref, atol=2e-4, rtol=2e-4), (out, ref)
    print("KERNEL_OK")
</pallas_src>

<mosaic_0001>
module attributes {stable_mosaic.version = 11 : i64} {
  func.func @lstm_kernel(%arg0: memref<8x20xf32, #tpu.memory_space<vmem>>, %arg1: memref<48x512xf32, #tpu.memory_space<vmem>>, %arg2: memref<24x128xf32, #tpu.memory_space<vmem>>, %arg3: memref<1x1xf32, #tpu.memory_space<vmem>>) attributes {dimension_semantics = [], scalar_prefetch = 0 : i64, scratch_operands = 0 : i64, tpu.core_type = #tpu.core_type<tc>} {
    %c0 = arith.constant 0 : index
    %c0_0 = arith.constant 0 : index
    %0 = vector.load %arg1[%c0, %c0_0] : memref<48x512xf32, #tpu.memory_space<vmem>>, vector<20x512xf32>
    %c24 = arith.constant 24 : index
    %c0_1 = arith.constant 0 : index
    %1 = vector.load %arg1[%c24, %c0_1] : memref<48x512xf32, #tpu.memory_space<vmem>>, vector<16x512xf32>
    %c40 = arith.constant 40 : index
    %c0_2 = arith.constant 0 : index
    %2 = vector.load %arg1[%c40, %c0_2] : memref<48x512xf32, #tpu.memory_space<vmem>>, vector<1x512xf32>
    %c0_3 = arith.constant 0 : index
    %c0_4 = arith.constant 0 : index
    %3 = vector.load %arg2[%c0_3, %c0_4] : memref<24x128xf32, #tpu.memory_space<vmem>>, vector<1x128xf32>
    %c1 = arith.constant 1 : index
    %c0_5 = arith.constant 0 : index
    %4 = vector.load %arg2[%c1, %c0_5] : memref<24x128xf32, #tpu.memory_space<vmem>>, vector<1x128xf32>
    %c0_6 = arith.constant 0 : index
    %c0_7 = arith.constant 0 : index
    %5 = vector.load %arg0[%c0_6, %c0_7] : memref<8x20xf32, #tpu.memory_space<vmem>>, vector<8x20xf32>
    %cst = arith.constant dense<0.000000e+00> : vector<8x512xf32>
    %6 = tpu.matmul %5, %0, %cst {dimension_numbers = #tpu.dot_dimension_numbers<[1], [0], [0], [1], [0, 0, 1, 1], [], []>} : vector<8x20xf32>, vector<20x512xf32>, vector<8x512xf32> -> vector<8x512xf32>
    %7 = vector.broadcast %2 : vector<1x512xf32> to vector<8x512xf32>
    %8 = arith.addf %6, %7 : vector<8x512xf32>
    %9 = vector.extract_strided_slice %8 {offsets = [0, 0], sizes = [1, 512], strides = [1, 1]} : vector<8x512xf32> to vector<1x512xf32>
    %10 = vector.extract_strided_slice %3 {offsets = [0, 0], sizes = [1, 16], strides = [1, 1]} : vector<1x128xf32> to vector<1x16xf32>
    %cst_8 = arith.constant dense<0.000000e+00> : vector<1x512xf32>
    %11 = tpu.matmul %10, %1, %cst_8 {dimension_numbers = #tpu.dot_dimension_numbers<[1], [0], [0], [1], [0, 0, 1, 1], [], []>} : vector<1x16xf32>, vector<16x512xf32>, vector<1x512xf32> -> vector<1x512xf32>
    %12 = arith.addf %9, %11 : vector<1x512xf32>
    %13 = arith.negf %12 : vector<1x512xf32>
    %14 = math.exp %13 : vector<1x512xf32>
    %cst_9 = arith.constant 1.000000e+00 : f32
    %15 = vector.broadcast %cst_9 : f32 to vector<1x512xf32>
    %16 = arith.addf %15, %14 : vector<1x512xf32>
    %17 = arith.divf %15, %16 : vector<1x512xf32>
    %18 = vector.extract_strided_slice %17 {offsets = [0, 0], sizes = [1, 128], strides = [1, 1]} : vector<1x512xf32> to vector<1x128xf32>
    %19 = vector.extract_strided_slice %17 {offsets = [0, 128], sizes = [1, 128], strides = [1, 1]} : vector<1x512xf32> to vector<1x128xf32>
    %20 = vector.extract_strided_slice %17 {offsets = [0, 256], sizes = [1, 128], strides = [1, 1]} : vector<1x512xf32> to vector<1x128xf32>
    %cst_10 = arith.constant 2.000000e+00 : f32
    %21 = vector.broadcast %cst_10 : f32 to vector<1x128xf32>
    %22 = arith.mulf %21, %20 : vector<1x128xf32>
    %cst_11 = arith.constant 1.000000e+00 : f32
    %23 = vector.broadcast %cst_11 : f32 to vector<1x128xf32>
    %24 = arith.subf %22, %23 : vector<1x128xf32>
    %25 = vector.extract_strided_slice %17 {offsets = [0, 384], sizes = [1, 128], strides = [1, 1]} : vector<1x512xf32> to vector<1x128xf32>
    %26 = arith.mulf %19, %4 : vector<1x128xf32>
    %27 = arith.mulf %18, %24 : vector<1x128xf32>
    %28 = arith.addf %26, %27 : vector<1x128xf32>
    %29 = math.tanh %28 : vector<1x128xf32>
    %30 = arith.mulf %25, %29 : vector<1x128xf32>
    %31 = vector.extract_strided_slice %8 {offsets = [1, 0], sizes = [1, 512], strides = [1, 1]} : vector<8x512xf32> to vector<1x512xf32>
    %32 = vector.extract_strided_slice %30 {offsets = [0, 0], sizes = [1, 16], strides = [1, 1]} : vector<1x128xf32> to vector<1x16xf32>
    %cst_12 = arith.constant dense<0.000000e+00> : vector<1x512xf32>
    %33 = tpu.matmul %32, %1, %cst_12 {dimension_numbers = #tpu.dot_dimension_numbers<[1], [0], [0], [1], [0, 0, 1, 1], [], []>} : vector<1x16xf32>, vector<16x512xf32>, vector<1x512xf32> -> vector<1x512xf32>
    %34 = arith.addf %31, %33 : vector<1x512xf32>
    %35 = arith.negf %34 : vector<1x512xf32>
    %36 = math.exp %35 : vector<1x512xf32>
    %cst_13 = arith.constant 1.000000e+00 : f32
    %37 = vector.broadcast %cst_13 : f32 to vector<1x512xf32>
    %38 = arith.addf %37, %36 : vector<1x512xf32>
    %39 = arith.divf %37, %38 : vector<1x512xf32>
    %40 = vector.extract_strided_slice %39 {offsets = [0, 0], sizes = [1, 128], strides = [1, 1]} : vector<1x512xf32> to vector<1x128xf32>
    %41 = vector.extract_strided_slice %39 {offsets = [0, 128], sizes = [1, 128], strides = [1, 1]} : vector<1x512xf32> to vector<1x128xf32>
    %42 = vector.extract_strided_slice %39 {offsets = [0, 256], sizes = [1, 128], strides = [1, 1]} : vector<1x512xf32> to vector<1x128xf32>
    %cst_14 = arith.constant 2.000000e+00 : f32
    %43 = vector.broadcast %cst_14 : f32 to vector<1x128xf32>
    %44 = arith.mulf %43, %42 : vector<1x128xf32>
    %cst_15 = arith.constant 1.000000e+00 : f32
    %45 = vector.broadcast %cst_15 : f32 to vector<1x128xf32>
    %46 = arith.subf %44, %45 : vector<1x128xf32>
    %47 = vector.extract_strided_slice %39 {offsets = [0, 384], sizes = [1, 128], strides = [1, 1]} : vector<1x512xf32> to vector<1x128xf32>
    %48 = arith.mulf %41, %28 : vector<1x128xf32>
    %49 = arith.mulf %40, %46 : vector<1x128xf32>
    %50 = arith.addf %48, %49 : vector<1x128xf32>
    %51 = math.tanh %50 : vector<1x128xf32>
    %52 = arith.mulf %47, %51 : vector<1x128xf32>
    %53 = vector.extract_strided_slice %8 {offsets = [2, 0], sizes = [1, 512], strides = [1, 1]} : vector<8x512xf32> to vector<1x512xf32>
    %54 = vector.extract_strided_slice %52 {offsets = [0, 0], sizes = [1, 16], strides = [1, 1]} : vector<1x128xf32> to vector<1x16xf32>
    %cst_16 = arith.constant dense<0.000000e+00> : vector<1x512xf32>
    %55 = tpu.matmul %54, %1, %cst_16 {dimension_numbers = #tpu.dot_dimension_numbers<[1], [0], [0], [1], [0, 0, 1, 1], [], []>} : vector<1x16xf32>, vector<16x512xf32>, vector<1x512xf32> -> vector<1x512xf32>
    %56 = arith.addf %53, %55 : vector<1x512xf32>
    %57 = arith.negf %56 : vector<1x512xf32>
    %58 = math.exp %57 : vector<1x512xf32>
    %cst_17 = arith.constant 1.000000e+00 : f32
    %59 = vector.broadcast %cst_17 : f32 to vector<1x512xf32>
    %60 = arith.addf %59, %58 : vector<1x512xf32>
    %61 = arith.divf %59, %60 : vector<1x512xf32>
    %62 = vector.extract_strided_slice %61 {offsets = [0, 0], sizes = [1, 128], strides = [1, 1]} : vector<1x512xf32> to vector<1x128xf32>
    %63 = vector.extract_strided_slice %61 {offsets = [0, 128], sizes = [1, 128], strides = [1, 1]} : vector<1x512xf32> to vector<1x128xf32>
    %64 = vector.extract_strided_slice %61 {offsets = [0, 256], sizes = [1, 128], strides = [1, 1]} : vector<1x512xf32> to vector<1x128xf32>
    %cst_18 = arith.constant 2.000000e+00 : f32
    %65 = vector.broadcast %cst_18 : f32 to vector<1x128xf32>
    %66 = arith.mulf %65, %64 : vector<1x128xf32>
    %cst_19 = arith.constant 1.000000e+00 : f32
    %67 = vector.broadcast %cst_19 : f32 to vector<1x128xf32>
    %68 = arith.subf %66, %67 : vector<1x128xf32>
    %69 = vector.extract_strided_slice %61 {offsets = [0, 384], sizes = [1, 128], strides = [1, 1]} : vector<1x512xf32> to vector<1x128xf32>
    %70 = arith.mulf %63, %50 : vector<1x128xf32>
    %71 = arith.mulf %62, %68 : vector<1x128xf32>
    %72 = arith.addf %70, %71 : vector<1x128xf32>
    %73 = math.tanh %72 : vector<1x128xf32>
    %74 = arith.mulf %69, %73 : vector<1x128xf32>
    %75 = vector.extract_strided_slice %8 {offsets = [3, 0], sizes = [1, 512], strides = [1, 1]} : vector<8x512xf32> to vector<1x512xf32>
    %76 = vector.extract_strided_slice %74 {offsets = [0, 0], sizes = [1, 16], strides = [1, 1]} : vector<1x128xf32> to vector<1x16xf32>
    %cst_20 = arith.constant dense<0.000000e+00> : vector<1x512xf32>
    %77 = tpu.matmul %76, %1, %cst_20 {dimension_numbers = #tpu.dot_dimension_numbers<[1], [0], [0], [1], [0, 0, 1, 1], [], []>} : vector<1x16xf32>, vector<16x512xf32>, vector<1x512xf32> -> vector<1x512xf32>
    %78 = arith.addf %75, %77 : vector<1x512xf32>
    %79 = arith.negf %78 : vector<1x512xf32>
    %80 = math.exp %79 : vector<1x512xf32>
    %cst_21 = arith.constant 1.000000e+00 : f32
    %81 = vector.broadcast %cst_21 : f32 to vector<1x512xf32>
    %82 = arith.addf %81, %80 : vector<1x512xf32>
    %83 = arith.divf %81, %82 : vector<1x512xf32>
    %84 = vector.extract_strided_slice %83 {offsets = [0, 0], sizes = [1, 128], strides = [1, 1]} : vector<1x512xf32> to vector<1x128xf32>
    %85 = vector.extract_strided_slice %83 {offsets = [0, 128], sizes = [1, 128], strides = [1, 1]} : vector<1x512xf32> to vector<1x128xf32>
    %86 = vector.extract_strided_slice %83 {offsets = [0, 256], sizes = [1, 128], strides = [1, 1]} : vector<1x512xf32> to vector<1x128xf32>
    %cst_22 = arith.constant 2.000000e+00 : f32
    %87 = vector.broadcast %cst_22 : f32 to vector<1x128xf32>
    %88 = arith.mulf %87, %86 : vector<1x128xf32>
    %cst_23 = arith.constant 1.000000e+00 : f32
    %89 = vector.broadcast %cst_23 : f32 to vector<1x128xf32>
    %90 = arith.subf %88, %89 : vector<1x128xf32>
    %91 = vector.extract_strided_slice %83 {offsets = [0, 384], sizes = [1, 128], strides = [1, 1]} : vector<1x512xf32> to vector<1x128xf32>
    %92 = arith.mulf %85, %72 : vector<1x128xf32>
    %93 = arith.mulf %84, %90 : vector<1x128xf32>
    %94 = arith.addf %92, %93 : vector<1x128xf32>
    %95 = math.tanh %94 : vector<1x128xf32>
    %96 = arith.mulf %91, %95 : vector<1x128xf32>
    %97 = vector.extract_strided_slice %8 {offsets = [4, 0], sizes = [1, 512], strides = [1, 1]} : vector<8x512xf32> to vector<1x512xf32>
    %98 = vector.extract_strided_slice %96 {offsets = [0, 0], sizes = [1, 16], strides = [1, 1]} : vector<1x128xf32> to vector<1x16xf32>
    %cst_24 = arith.constant dense<0.000000e+00> : vector<1x512xf32>
    %99 = tpu.matmul %98, %1, %cst_24 {dimension_numbers = #tpu.dot_dimension_numbers<[1], [0], [0], [1], [0, 0, 1, 1], [], []>} : vector<1x16xf32>, vector<16x512xf32>, vector<1x512xf32> -> vector<1x512xf32>
    %100 = arith.addf %97, %99 : vector<1x512xf32>
    %101 = arith.negf %100 : vector<1x512xf32>
    %102 = math.exp %101 : vector<1x512xf32>
    %cst_25 = arith.constant 1.000000e+00 : f32
    %103 = vector.broadcast %cst_25 : f32 to vector<1x512xf32>
    %104 = arith.addf %103, %102 : vector<1x512xf32>
    %105 = arith.divf %103, %104 : vector<1x512xf32>
    %106 = vector.extract_strided_slice %105 {offsets = [0, 0], sizes = [1, 128], strides = [1, 1]} : vector<1x512xf32> to vector<1x128xf32>
    %107 = vector.extract_strided_slice %105 {offsets = [0, 128], sizes = [1, 128], strides = [1, 1]} : vector<1x512xf32> to vector<1x128xf32>
    %108 = vector.extract_strided_slice %105 {offsets = [0, 256], sizes = [1, 128], strides = [1, 1]} : vector<1x512xf32> to vector<1x128xf32>
    %cst_26 = arith.constant 2.000000e+00 : f32
    %109 = vector.broadcast %cst_26 : f32 to vector<1x128xf32>
    %110 = arith.mulf %109, %108 : vector<1x128xf32>
    %cst_27 = arith.constant 1.000000e+00 : f32
    %111 = vector.broadcast %cst_27 : f32 to vector<1x128xf32>
    %112 = arith.subf %110, %111 : vector<1x128xf32>
    %113 = vector.extract_strided_slice %105 {offsets = [0, 384], sizes = [1, 128], strides = [1, 1]} : vector<1x512xf32> to vector<1x128xf32>
    %114 = arith.mulf %107, %94 : vector<1x128xf32>
    %115 = arith.mulf %106, %112 : vector<1x128xf32>
    %116 = arith.addf %114, %115 : vector<1x128xf32>
    %117 = math.tanh %116 : vector<1x128xf32>
    %118 = arith.mulf %113, %117 : vector<1x128xf32>
    %119 = vector.extract_strided_slice %8 {offsets = [5, 0], sizes = [1, 512], strides = [1, 1]} : vector<8x512xf32> to vector<1x512xf32>
    %120 = vector.extract_strided_slice %118 {offsets = [0, 0], sizes = [1, 16], strides = [1, 1]} : vector<1x128xf32> to vector<1x16xf32>
    %cst_28 = arith.constant dense<0.000000e+00> : vector<1x512xf32>
    %121 = tpu.matmul %120, %1, %cst_28 {dimension_numbers = #tpu.dot_dimension_numbers<[1], [0], [0], [1], [0, 0, 1, 1], [], []>} : vector<1x16xf32>, vector<16x512xf32>, vector<1x512xf32> -> vector<1x512xf32>
    %122 = arith.addf %119, %121 : vector<1x512xf32>
    %123 = arith.negf %122 : vector<1x512xf32>
    %124 = math.exp %123 : vector<1x512xf32>
    %cst_29 = arith.constant 1.000000e+00 : f32
    %125 = vector.broadcast %cst_29 : f32 to vector<1x512xf32>
    %126 = arith.addf %125, %124 : vector<1x512xf32>
    %127 = arith.divf %125, %126 : vector<1x512xf32>
    %128 = vector.extract_strided_slice %127 {offsets = [0, 0], sizes = [1, 128], strides = [1, 1]} : vector<1x512xf32> to vector<1x128xf32>
    %129 = vector.extract_strided_slice %127 {offsets = [0, 128], sizes = [1, 128], strides = [1, 1]} : vector<1x512xf32> to vector<1x128xf32>
    %130 = vector.extract_strided_slice %127 {offsets = [0, 256], sizes = [1, 128], strides = [1, 1]} : vector<1x512xf32> to vector<1x128xf32>
    %cst_30 = arith.constant 2.000000e+00 : f32
    %131 = vector.broadcast %cst_30 : f32 to vector<1x128xf32>
    %132 = arith.mulf %131, %130 : vector<1x128xf32>
    %cst_31 = arith.constant 1.000000e+00 : f32
    %133 = vector.broadcast %cst_31 : f32 to vector<1x128xf32>
    %134 = arith.subf %132, %133 : vector<1x128xf32>
    %135 = vector.extract_strided_slice %127 {offsets = [0, 384], sizes = [1, 128], strides = [1, 1]} : vector<1x512xf32> to vector<1x128xf32>
    %136 = arith.mulf %129, %116 : vector<1x128xf32>
    %137 = arith.mulf %128, %134 : vector<1x128xf32>
    %138 = arith.addf %136, %137 : vector<1x128xf32>
    %139 = math.tanh %138 : vector<1x128xf32>
    %140 = arith.mulf %135, %139 : vector<1x128xf32>
    %141 = vector.extract_strided_slice %8 {offsets = [6, 0], sizes = [1, 512], strides = [1, 1]} : vector<8x512xf32> to vector<1x512xf32>
    %142 = vector.extract_strided_slice %140 {offsets = [0, 0], sizes = [1, 16], strides = [1, 1]} : vector<1x128xf32> to vector<1x16xf32>
    %cst_32 = arith.constant dense<0.000000e+00> : vector<1x512xf32>
    %143 = tpu.matmul %142, %1, %cst_32 {dimension_numbers = #tpu.dot_dimension_numbers<[1], [0], [0], [1], [0, 0, 1, 1], [], []>} : vector<1x16xf32>, vector<16x512xf32>, vector<1x512xf32> -> vector<1x512xf32>
    %144 = arith.addf %141, %143 : vector<1x512xf32>
    %145 = arith.negf %144 : vector<1x512xf32>
    %146 = math.exp %145 : vector<1x512xf32>
    %cst_33 = arith.constant 1.000000e+00 : f32
    %147 = vector.broadcast %cst_33 : f32 to vector<1x512xf32>
    %148 = arith.addf %147, %146 : vector<1x512xf32>
    %149 = arith.divf %147, %148 : vector<1x512xf32>
    %150 = vector.extract_strided_slice %149 {offsets = [0, 0], sizes = [1, 128], strides = [1, 1]} : vector<1x512xf32> to vector<1x128xf32>
    %151 = vector.extract_strided_slice %149 {offsets = [0, 128], sizes = [1, 128], strides = [1, 1]} : vector<1x512xf32> to vector<1x128xf32>
    %152 = vector.extract_strided_slice %149 {offsets = [0, 256], sizes = [1, 128], strides = [1, 1]} : vector<1x512xf32> to vector<1x128xf32>
    %cst_34 = arith.constant 2.000000e+00 : f32
    %153 = vector.broadcast %cst_34 : f32 to vector<1x128xf32>
    %154 = arith.mulf %153, %152 : vector<1x128xf32>
    %cst_35 = arith.constant 1.000000e+00 : f32
    %155 = vector.broadcast %cst_35 : f32 to vector<1x128xf32>
    %156 = arith.subf %154, %155 : vector<1x128xf32>
    %157 = vector.extract_strided_slice %149 {offsets = [0, 384], sizes = [1, 128], strides = [1, 1]} : vector<1x512xf32> to vector<1x128xf32>
    %158 = arith.mulf %151, %138 : vector<1x128xf32>
    %159 = arith.mulf %150, %156 : vector<1x128xf32>
    %160 = arith.addf %158, %159 : vector<1x128xf32>
    %161 = math.tanh %160 : vector<1x128xf32>
    %162 = arith.mulf %157, %161 : vector<1x128xf32>
    %163 = vector.extract_strided_slice %8 {offsets = [7, 0], sizes = [1, 512], strides = [1, 1]} : vector<8x512xf32> to vector<1x512xf32>
    %164 = vector.extract_strided_slice %162 {offsets = [0, 0], sizes = [1, 16], strides = [1, 1]} : vector<1x128xf32> to vector<1x16xf32>
    %cst_36 = arith.constant dense<0.000000e+00> : vector<1x512xf32>
    %165 = tpu.matmul %164, %1, %cst_36 {dimension_numbers = #tpu.dot_dimension_numbers<[1], [0], [0], [1], [0, 0, 1, 1], [], []>} : vector<1x16xf32>, vector<16x512xf32>, vector<1x512xf32> -> vector<1x512xf32>
    %166 = arith.addf %163, %165 : vector<1x512xf32>
    %167 = arith.negf %166 : vector<1x512xf32>
    %168 = math.exp %167 : vector<1x512xf32>
    %cst_37 = arith.constant 1.000000e+00 : f32
    %169 = vector.broadcast %cst_37 : f32 to vector<1x512xf32>
    %170 = arith.addf %169, %168 : vector<1x512xf32>
    %171 = arith.divf %169, %170 : vector<1x512xf32>
    %172 = vector.extract_strided_slice %171 {offsets = [0, 0], sizes = [1, 128], strides = [1, 1]} : vector<1x512xf32> to vector<1x128xf32>
    %173 = vector.extract_strided_slice %171 {offsets = [0, 128], sizes = [1, 128], strides = [1, 1]} : vector<1x512xf32> to vector<1x128xf32>
    %174 = vector.extract_strided_slice %171 {offsets = [0, 256], sizes = [1, 128], strides = [1, 1]} : vector<1x512xf32> to vector<1x128xf32>
    %cst_38 = arith.constant 2.000000e+00 : f32
    %175 = vector.broadcast %cst_38 : f32 to vector<1x128xf32>
    %176 = arith.mulf %175, %174 : vector<1x128xf32>
    %cst_39 = arith.constant 1.000000e+00 : f32
    %177 = vector.broadcast %cst_39 : f32 to vector<1x128xf32>
    %178 = arith.subf %176, %177 : vector<1x128xf32>
    %179 = vector.extract_strided_slice %171 {offsets = [0, 384], sizes = [1, 128], strides = [1, 1]} : vector<1x512xf32> to vector<1x128xf32>
    %180 = arith.mulf %173, %160 : vector<1x128xf32>
    %181 = arith.mulf %172, %178 : vector<1x128xf32>
    %182 = arith.addf %180, %181 : vector<1x128xf32>
    %183 = math.tanh %182 : vector<1x128xf32>
    %184 = arith.mulf %179, %183 : vector<1x128xf32>
    %c8 = arith.constant 8 : index
    %c0_40 = arith.constant 0 : index
    %185 = vector.load %arg2[%c8, %c0_40] : memref<24x128xf32, #tpu.memory_space<vmem>>, vector<16x1xf32>
    %c2 = arith.constant 2 : index
    %c0_41 = arith.constant 0 : index
    %186 = vector.load %arg2[%c2, %c0_41] : memref<24x128xf32, #tpu.memory_space<vmem>>, vector<1x1xf32>
    %187 = vector.extract_strided_slice %184 {offsets = [0, 0], sizes = [1, 16], strides = [1, 1]} : vector<1x128xf32> to vector<1x16xf32>
    %cst_42 = arith.constant dense<0.000000e+00> : vector<1x1xf32>
    %188 = tpu.matmul %187, %185, %cst_42 {dimension_numbers = #tpu.dot_dimension_numbers<[1], [0], [0], [1], [0, 0, 1, 1], [], []>} : vector<1x16xf32>, vector<16x1xf32>, vector<1x1xf32> -> vector<1x1xf32>
    %189 = arith.addf %188, %186 : vector<1x1xf32>
    %c0_43 = arith.constant 0 : index
    %c0_44 = arith.constant 0 : index
    %190 = vector.load %arg3[%c0_43, %c0_44] : memref<1x1xf32, #tpu.memory_space<vmem>>, vector<1x1xf32>
    tpu.vector_store %arg3[%c0_43, %c0_44], %189 {strides = array<i32>} : memref<1x1xf32, #tpu.memory_space<vmem>>, vector<1x1xf32>,
    return
  }
}

</mosaic_0001>

<llo_original>
// kernel: tpu_custom_call.1
$region0: #{tpu_custom_call.1}
  #allocation0 [shape = 'u32[]', space=smem, size = 0x4, offset = 0x4, fixed_abs, tag = 'smem constant byte address 0x4 - core index']
  #allocation1 [shape = 'u32[144,128]{1,0:T(1,128)}', space=vmem, size = 0x12000, scoped, tag = 'internal scratch']
  %s0 = inlined_call_operand.hbm [shape: f32[8,20], index: 0, kind: input, shape index: {}]
  %s1 = inlined_call_operand.hbm [shape: f32[48,512], index: 1, kind: input, shape index: {}]
  %s2 = inlined_call_operand.hbm [shape: f32[24,128], index: 2, kind: input, shape index: {}]
  %s3 = inlined_call_operand.hbm [shape: f32[1,1], index: 3, kind: output, shape index: {}]
  %s4 = sld [smem:[#allocation0]]
  $region34: #{tpu_custom_call.1} parent=0
    _
  %s6 = ssub.s32 1, %s4
  %s7 = scalar_select 0, %s6, %s4
  $region1: #{tpu_custom_call.1} parent=0
    #allocation2 [shape = 'u8[4096]{0}', space=vmem, size = 0x1000, scoped, tag = 'input window, operand 0, single buffered']
    #allocation3 [shape = 's32[1]{0}', space=sflag, size = 0x4, scoped, tag = 'scoped memory for tpu_custom_call.1']
    #allocation4 [shape = 's32[1]{0}', space=sflag, size = 0x4, scoped, tag = 'scoped memory for tpu_custom_call.1']
    #allocation5 [shape = 'u8[98304]{0}', space=vmem, size = 0x18000, scoped, tag = 'input window, operand 1, single buffered']
    #allocation6 [shape = 's32[1]{0}', space=sflag, size = 0x4, scoped, tag = 'scoped memory for tpu_custom_call.1']
    #allocation7 [shape = 'u8[12288]{0}', space=vmem, size = 0x3000, scoped, tag = 'input window, operand 2, single buffered']
    #allocation8 [shape = 'u8[512]{0}', space=vmem, size = 0x400, scoped, tag = 'output window, operand 0, single buffered']
    %8 = vsyncpa [#allocation3], 0
    %9 = vsyncpa [#allocation6], 0
    %10 = vsyncpa [#allocation4], 0
    // Predicated region
    $region2: #{tpu_custom_call.1} parent=1 // pred_check
      _
    $region3: #{tpu_custom_call.1} parent=1 // pred_check_branch
      %12 = sbr.rel (0) target = $region5
    $region4: #{tpu_custom_call.1} parent=1 // pred_region
      %s14 = ssub.s32 128, 128
      %15 = vsyncadd [#allocation3], %s14
      %s17 = sshll.u32 [#allocation2], 4
      %s18 = int_to_ptr.vmem [resolvable:$true] %s17
      %20 = dma.hbm_to_vmem [thread:$0]  %s0, 128, %s18, [#allocation3]
    $region5: #{tpu_custom_call.1} parent=1 // pred_fallthru
      _
    // Predicated region
    $region6: #{tpu_custom_call.1} parent=1 // pred_check
      _
    $region7: #{tpu_custom_call.1} parent=1 // pred_check_branch
      %22 = sbr.rel (0) target = $region9
    $region8: #{tpu_custom_call.1} parent=1 // pred_region
      %s24 = ssub.s32 3072, 3072
      %25 = vsyncadd [#allocation6], %s24
      %s26 = sshll.u32 [#allocation5], 4
      %s27 = int_to_ptr.vmem [resolvable:$true] %s26
      %32 = dma.hbm_to_vmem [thread:$0]  %s1, 3072, %s27, [#allocation6], 512, 512, 32
    $region9: #{tpu_custom_call.1} parent=1 // pred_fallthru
      _
    // Predicated region
    $region10: #{tpu_custom_call.1} parent=1 // pred_check
      _
    $region11: #{tpu_custom_call.1} parent=1 // pred_check_branch
      %34 = sbr.rel (0) target = $region13
    $region12: #{tpu_custom_call.1} parent=1 // pred_region
      %s36 = ssub.s32 384, 384
      %37 = vsyncadd [#allocation6], %s36
      %s38 = sshll.u32 [#allocation7], 4
      %s39 = int_to_ptr.vmem [resolvable:$true] %s38
      %44 = dma.hbm_to_vmem [thread:$0]  %s2, 384, %s39, [#allocation6], 128, 128, 8
    $region13: #{tpu_custom_call.1} parent=1 // pred_fallthru
      _
    // Predicated region
    $region14: #{tpu_custom_call.1} parent=1 // pred_check
      _
    $region15: #{tpu_custom_call.1} parent=1 // pred_check_branch
      %46 = sbr.rel (0) target = $region17
    $region16: #{tpu_custom_call.1} parent=1 // pred_region
      %47 = dma.done [#allocation3], 128
    $region17: #{tpu_custom_call.1} parent=1 // pred_fallthru
      _
    // Predicated region
    $region18: #{tpu_custom_call.1} parent=1 // pred_check
      _
    $region19: #{tpu_custom_call.1} parent=1 // pred_check_branch
      %49 = sbr.rel (0) target = $region21
    $region20: #{tpu_custom_call.1} parent=1 // pred_region
      %50 = dma.done [#allocation6], 3072
    $region21: #{tpu_custom_call.1} parent=1 // pred_fallthru
      _
    // Predicated region
    $region22: #{tpu_custom_call.1} parent=1 // pred_check
      _
    $region23: #{tpu_custom_call.1} parent=1 // pred_check_branch
      %52 = sbr.rel (0) target = $region25
    $region24: #{tpu_custom_call.1} parent=1 // pred_region
      %53 = dma.done [#allocation6], 384
    $region25: #{tpu_custom_call.1} parent=1 // pred_fallthru
      _
    %v54 = vld [vmem:[#allocation5] sm:$0xff]
    %v55 = vld [vmem:[#allocation5 + $0x8] sm:$0xff]
    %v56 = vld [vmem:[#allocation5 + $0x10] sm:$0xff]
    %v57 = vld [vmem:[#allocation5 + $0x18] sm:$0xff]
    %v58 = vld [vmem:[#allocation5 + $0x20] sm:$0xff]
    %v59 = vld [vmem:[#allocation5 + $0x28] sm:$0xff]
    %v60 = vld [vmem:[#allocation5 + $0x30] sm:$0xff]
    %v61 = vld [vmem:[#allocation5 + $0x38] sm:$0xff]
    %v62 = vld [vmem:[#allocation5 + $0x40] sm:$0xf]
    %v63 = vld [vmem:[#allocation5 + $0x48] sm:$0xf]
    %v64 = vld [vmem:[#allocation5 + $0x50] sm:$0xf]
    %v65 = vld [vmem:[#allocation5 + $0x58] sm:$0xf]
    %v66 = vld [vmem:[#allocation5 + $0x60] sm:$0xff]
    %v67 = vld [vmem:[#allocation5 + $0x68] sm:$0xff]
    %v68 = vld [vmem:[#allocation5 + $0x70] sm:$0xff]
    %v69 = vld [vmem:[#allocation5 + $0x78] sm:$0xff]
    %v70 = vld [vmem:[#allocation5 + $0x80] sm:$0xff]
    %v71 = vld [vmem:[#allocation5 + $0x88] sm:$0xff]
    %v72 = vld [vmem:[#allocation5 + $0x90] sm:$0xff]
    %v73 = vld [vmem:[#allocation5 + $0x98] sm:$0xff]
    %s74 = scalar_lea.vmem [#allocation5], 160
    %v75 = vld [vmem:[%s74] ss:$8 sm:$0xf]
    %v76 = vld [vmem:[#allocation7] sm:$0x1]
    %v77 = vld [vmem:[#allocation7 + $0x1] sm:$0x1]
    %v78 = vld [vmem:[#allocation2] sm:$0xff]
    %v80 = vlaneseq
    %v81 = vshrl.u32 %v80, 7
    %v82 = vsub.s32 0, %v81
    %v83 = vrot.slane %v75, %v82
    %v84 = vlaneseq
    %v85 = vshrl.u32 %v84, 7
    %v86 = vsub.s32 1, %v85
    %v87 = vrot.slane %v75, %v86
    %v88 = vlaneseq
    %v89 = vshrl.u32 %v88, 7
    %v90 = vsub.s32 2, %v89
    %v91 = vrot.slane %v75, %v90
    %v92 = vlaneseq
    %v93 = vshrl.u32 %v92, 7
    %v94 = vsub.s32 3, %v93
    %v95 = vrot.slane %v75, %v94
    %vm100 = vcmask 162816
    %v102 = vsel %vm100, %v78, 0
    %vm104 = vcmask 1043456
    %v106 = vsel %vm104, %v62, 0
    %v109 = vsel %vm104, %v63, 0
    %v112 = vsel %vm104, %v64, 0
    %v115 = vsel %vm104, %v65, 0
    %117 = vmatprep.subr.mxu0 0.0
    %118 = vmatpush1.msra.mxu0 0.0
    %119 = vmatprep.subr.mxu0 0.0
    %120 = vmatpush1.msra.mxu0 0.0
    %121 = vmatprep.subr.mxu0 0.0
    %122 = vmatpush1.msra.mxu0 0.0
    %123 = vmatprep.subr.mxu0 0.0
    %124 = vmatpush1.msra.mxu0 0.0
    %125 = vmatprep.subr.mxu0 0.0
    %126 = vmatpush1.msra.mxu0 0.0
    %127 = vmatprep.subr.mxu0 0.0
    %128 = vmatpush1.msra.mxu0 0.0
    %129 = vmatprep.subr.mxu0 0.0
    %130 = vmatpush1.msra.mxu0 0.0
    %131 = vmatprep.subr.mxu0 0.0
    %132 = vmatpush1.msra.mxu0 0.0
    %133 = vmatprep.subr.mxu0 0.0
    %134 = vmatpush1.msra.mxu0 0.0
    %135 = vmatprep.subr.mxu0 0.0
    %136 = vmatpush1.msra.mxu0 0.0
    %137 = vmatprep.subr.mxu0 0.0
    %138 = vmatpush1.msra.mxu0 0.0
    %139 = vmatprep.subr.mxu0 0.0
    %140 = vmatpush1.msra.mxu0 0.0
    %141 = vmatprep.subr.mxu0 0.0
    %142 = vmatpush1.msra.mxu0 0.0
    %143 = vmatprep.subr.mxu0 %v109
    %144 = vmatpush1.msra.mxu0 %v106
    %145 = vmatprep.subr.mxu0 %v59
    %146 = vmatpush1.msra.mxu0 %v58
    %147 = vmatprep.subr.mxu0 %v55
    %148 = vmatpush1.msra.mxu0 %v54
    %149 = vmatprep.subr.mxu0 0.0
    %150 = vmatpush2.msra.mxu0 0.0
    %151 = vmatprep.subr.mxu0 0.0
    %152 = vmatpush2.msra.mxu0 0.0
    %153 = vmatprep.subr.mxu0 0.0
    %154 = vmatpush2.msra.mxu0 0.0
    %155 = vmatprep.subr.mxu0 0.0
    %156 = vmatpush2.msra.mxu0 0.0
    %157 = vmatprep.subr.mxu0 0.0
    %158 = vmatpush2.msra.mxu0 0.0
    %159 = vmatprep.subr.mxu0 0.0
    %160 = vmatpush2.msra.mxu0 0.0
    %161 = vmatprep.subr.mxu0 0.0
    %162 = vmatpush2.msra.mxu0 0.0
    %163 = vmatprep.subr.mxu0 0.0
    %164 = vmatpush2.msra.mxu0 0.0
    %165 = vmatprep.subr.mxu0 0.0
    %166 = vmatpush2.msra.mxu0 0.0
    %167 = vmatprep.subr.mxu0 0.0
    %168 = vmatpush2.msra.mxu0 0.0
    %169 = vmatprep.subr.mxu0 0.0
    %170 = vmatpush2.msra.mxu0 0.0
    %171 = vmatprep.subr.mxu0 0.0
    %172 = vmatpush2.msra.mxu0 0.0
    %173 = vmatprep.subr.mxu0 0.0
    %174 = vmatpush2.msra.mxu0 0.0
    %175 = vmatprep.subr.mxu0 0.0
    %176 = vmatpush2.msra.mxu0 0.0
    %177 = vmatprep.subr.mxu0 0.0
    %178 = vmatpush2.msra.mxu0 0.0
    %179 = vmatprep.subr.mxu0 0.0
    %180 = vmatpush2.msra.mxu0 0.0
    %181 = vmatprep.mubr.f32.mxu0 0.0
    %182 = vmatmul.mubr.f32.gmra.mxu0 %v102
    %v183 = vpop.f32.mrf.mxu0
    %v184 = vadd.f32 %v83, %v183
    %v185 = vpop.f32.mrf.mxu0
    %v186 = vadd.f32 %v87, %v185
    %187 = vdwg.mxu0
    %188 = vmatprep.subr.mxu0 0.0
    %189 = vmatpush1.msra.mxu0 0.0
    %190 = vmatprep.subr.mxu0 0.0
    %191 = vmatpush1.msra.mxu0 0.0
    %192 = vmatprep.subr.mxu0 0.0
    %193 = vmatpush1.msra.mxu0 0.0
    %194 = vmatprep.subr.mxu0 0.0
    %195 = vmatpush1.msra.mxu0 0.0
    %196 = vmatprep.subr.mxu0 0.0
    %197 = vmatpush1.msra.mxu0 0.0
    %198 = vmatprep.subr.mxu0 0.0
    %199 = vmatpush1.msra.mxu0 0.0
    %200 = vmatprep.subr.mxu0 0.0
    %201 = vmatpush1.msra.mxu0 0.0
    %202 = vmatprep.subr.mxu0 0.0
    %203 = vmatpush1.msra.mxu0 0.0
    %204 = vmatprep.subr.mxu0 0.0
    %205 = vmatpush1.msra.mxu0 0.0
    %206 = vmatprep.subr.mxu0 0.0
    %207 = vmatpush1.msra.mxu0 0.0
    %208 = vmatprep.subr.mxu0 0.0
    %209 = vmatpush1.msra.mxu0 0.0
    %210 = vmatprep.subr.mxu0 0.0
    %211 = vmatpush1.msra.mxu0 0.0
    %212 = vmatprep.subr.mxu0 0.0
    %213 = vmatpush1.msra.mxu0 0.0
    %214 = vmatprep.subr.mxu0 %v115
    %215 = vmatpush1.msra.mxu0 %v112
    %216 = vmatprep.subr.mxu0 %v61
    %217 = vmatpush1.msra.mxu0 %v60
    %218 = vmatprep.subr.mxu0 %v57
    %219 = vmatpush1.msra.mxu0 %v56
    %220 = vmatprep.subr.mxu0 0.0
    %221 = vmatpush2.msra.mxu0 0.0
    %222 = vmatprep.subr.mxu0 0.0
    %223 = vmatpush2.msra.mxu0 0.0
    %224 = vmatprep.subr.mxu0 0.0
    %225 = vmatpush2.msra.mxu0 0.0
    %226 = vmatprep.subr.mxu0 0.0
    %227 = vmatpush2.msra.mxu0 0.0
    %228 = vmatprep.subr.mxu0 0.0
    %229 = vmatpush2.msra.mxu0 0.0
    %230 = vmatprep.subr.mxu0 0.0
    %231 = vmatpush2.msra.mxu0 0.0
    %232 = vmatprep.subr.mxu0 0.0
    %233 = vmatpush2.msra.mxu0 0.0
    %234 = vmatprep.subr.mxu0 0.0
    %235 = vmatpush2.msra.mxu0 0.0
    %236 = vmatprep.subr.mxu0 0.0
    %237 = vmatpush2.msra.mxu0 0.0
    %238 = vmatprep.subr.mxu0 0.0
    %239 = vmatpush2.msra.mxu0 0.0
    %240 = vmatprep.subr.mxu0 0.0
    %241 = vmatpush2.msra.mxu0 0.0
    %242 = vmatprep.subr.mxu0 0.0
    %243 = vmatpush2.msra.mxu0 0.0
    %244 = vmatprep.subr.mxu0 0.0
    %245 = vmatpush2.msra.mxu0 0.0
    %246 = vmatprep.subr.mxu0 0.0
    %247 = vmatpush2.msra.mxu0 0.0
    %248 = vmatprep.subr.mxu0 0.0
    %249 = vmatpush2.msra.mxu0 0.0
    %250 = vmatprep.subr.mxu0 0.0
    %251 = vmatpush2.msra.mxu0 0.0
    %252 = vmatprep.mubr.f32.mxu0 0.0
    %253 = vmatmul.mubr.f32.gmra.mxu0 %v102
    %v254 = vpop.f32.mrf.mxu0
    %v255 = vadd.f32 %v91, %v254
    %v256 = vpop.f32.mrf.mxu0
    %v257 = vadd.f32 %v95, %v256
    %258 = vdwg.mxu0
    %vm259 = vcmask 130048
    %v261 = vsel %vm259, %v76, 0
    %263 = vmatprep.subr.mxu0 0.0
    %264 = vmatpush1.msra.mxu0 0.0
    %265 = vmatprep.subr.mxu0 0.0
    %266 = vmatpush1.msra.mxu0 0.0
    %267 = vmatprep.subr.mxu0 0.0
    %268 = vmatpush1.msra.mxu0 0.0
    %269 = vmatprep.subr.mxu0 0.0
    %270 = vmatpush1.msra.mxu0 0.0
    %271 = vmatprep.subr.mxu0 0.0
    %272 = vmatpush1.msra.mxu0 0.0
    %273 = vmatprep.subr.mxu0 0.0
    %274 = vmatpush1.msra.mxu0 0.0
    %275 = vmatprep.subr.mxu0 0.0
    %276 = vmatpush1.msra.mxu0 0.0
    %277 = vmatprep.subr.mxu0 0.0
    %278 = vmatpush1.msra.mxu0 0.0
    %279 = vmatprep.subr.mxu0 0.0
    %280 = vmatpush1.msra.mxu0 0.0
    %281 = vmatprep.subr.mxu0 0.0
    %282 = vmatpush1.msra.mxu0 0.0
    %283 = vmatprep.subr.mxu0 0.0
    %284 = vmatpush1.msra.mxu0 0.0
    %285 = vmatprep.subr.mxu0 0.0
    %286 = vmatpush1.msra.mxu0 0.0
    %287 = vmatprep.subr.mxu0 0.0
    %288 = vmatpush1.msra.mxu0 0.0
    %289 = vmatprep.subr.mxu0 0.0
    %290 = vmatpush1.msra.mxu0 0.0
    %291 = vmatprep.subr.mxu0 %v71
    %292 = vmatpush1.msra.mxu0 %v70
    %293 = vmatprep.subr.mxu0 %v67
    %294 = vmatpush1.msra.mxu0 %v66
    %295 = vmatprep.subr.mxu0 0.0
    %296 = vmatpush2.msra.mxu0 0.0
    %297 = vmatprep.subr.mxu0 0.0
    %298 = vmatpush2.msra.mxu0 0.0
    %299 = vmatprep.subr.mxu0 0.0
    %300 = vmatpush2.msra.mxu0 0.0
    %301 = vmatprep.subr.mxu0 0.0
    %302 = vmatpush2.msra.mxu0 0.0
    %303 = vmatprep.subr.mxu0 0.0
    %304 = vmatpush2.msra.mxu0 0.0
    %305 = vmatprep.subr.mxu0 0.0
    %306 = vmatpush2.msra.mxu0 0.0
    %307 = vmatprep.subr.mxu0 0.0
    %308 = vmatpush2.msra.mxu0 0.0
    %309 = vmatprep.subr.mxu0 0.0
    %310 = vmatpush2.msra.mxu0 0.0
    %311 = vmatprep.subr.mxu0 0.0
    %312 = vmatpush2.msra.mxu0 0.0
    %313 = vmatprep.subr.mxu0 0.0
    %314 = vmatpush2.msra.mxu0 0.0
    %315 = vmatprep.subr.mxu0 0.0
    %316 = vmatpush2.msra.mxu0 0.0
    %317 = vmatprep.subr.mxu0 0.0
    %318 = vmatpush2.msra.mxu0 0.0
    %319 = vmatprep.subr.mxu0 0.0
    %320 = vmatpush2.msra.mxu0 0.0
    %321 = vmatprep.subr.mxu0 0.0
    %322 = vmatpush2.msra.mxu0 0.0
    %323 = vmatprep.subr.mxu0 0.0
    %324 = vmatpush2.msra.mxu0 0.0
    %325 = vmatprep.subr.mxu0 0.0
    %326 = vmatpush2.msra.mxu0 0.0
    %327 = vmatprep.mubr.f32.mxu0 0.0
    %328 = vmatmul.mubr.f32.gmra.mxu0 %v261
    %v329 = vpop.f32.mrf.mxu0
    %v330 = vadd.f32 0.0, %v329
    %v331 = vpop.f32.mrf.mxu0
    %v332 = vadd.f32 0.0, %v331
    %333 = vdwg.mxu0
    %334 = vmatprep.subr.mxu0 0.0
    %335 = vmatpush1.msra.mxu0 0.0
    %336 = vmatprep.subr.mxu0 0.0
    %337 = vmatpush1.msra.mxu0 0.0
    %338 = vmatprep.subr.mxu0 0.0
    %339 = vmatpush1.msra.mxu0 0.0
    %340 = vmatprep.subr.mxu0 0.0
    %341 = vmatpush1.msra.mxu0 0.0
    %342 = vmatprep.subr.mxu0 0.0
    %343 = vmatpush1.msra.mxu0 0.0
    %344 = vmatprep.subr.mxu0 0.0
    %345 = vmatpush1.msra.mxu0 0.0
    %346 = vmatprep.subr.mxu0 0.0
    %347 = vmatpush1.msra.mxu0 0.0
    %348 = vmatprep.subr.mxu0 0.0
    %349 = vmatpush1.msra.mxu0 0.0
    %350 = vmatprep.subr.mxu0 0.0
    %351 = vmatpush1.msra.mxu0 0.0
    %352 = vmatprep.subr.mxu0 0.0
    %353 = vmatpush1.msra.mxu0 0.0
    %354 = vmatprep.subr.mxu0 0.0
    %355 = vmatpush1.msra.mxu0 0.0
    %356 = vmatprep.subr.mxu0 0.0
    %357 = vmatpush1.msra.mxu0 0.0
    %358 = vmatprep.subr.mxu0 0.0
    %359 = vmatpush1.msra.mxu0 0.0
    %360 = vmatprep.subr.mxu0 0.0
    %361 = vmatpush1.msra.mxu0 0.0
    %362 = vmatprep.subr.mxu0 %v73
    %363 = vmatpush1.msra.mxu0 %v72
    %364 = vmatprep.subr.mxu0 %v69
    %365 = vmatpush1.msra.mxu0 %v68
    %366 = vmatprep.subr.mxu0 0.0
    %367 = vmatpush2.msra.mxu0 0.0
    %368 = vmatprep.subr.mxu0 0.0
    %369 = vmatpush2.msra.mxu0 0.0
    %370 = vmatprep.subr.mxu0 0.0
    %371 = vmatpush2.msra.mxu0 0.0
    %372 = vmatprep.subr.mxu0 0.0
    %373 = vmatpush2.msra.mxu0 0.0
    %374 = vmatprep.subr.mxu0 0.0
    %375 = vmatpush2.msra.mxu0 0.0
    %376 = vmatprep.subr.mxu0 0.0
    %377 = vmatpush2.msra.mxu0 0.0
    %378 = vmatprep.subr.mxu0 0.0
    %379 = vmatpush2.msra.mxu0 0.0
    %380 = vmatprep.subr.mxu0 0.0
    %381 = vmatpush2.msra.mxu0 0.0
    %382 = vmatprep.subr.mxu0 0.0
    %383 = vmatpush2.msra.mxu0 0.0
    %384 = vmatprep.subr.mxu0 0.0
    %385 = vmatpush2.msra.mxu0 0.0
    %386 = vmatprep.subr.mxu0 0.0
    %387 = vmatpush2.msra.mxu0 0.0
    %388 = vmatprep.subr.mxu0 0.0
    %389 = vmatpush2.msra.mxu0 0.0
    %390 = vmatprep.subr.mxu0 0.0
    %391 = vmatpush2.msra.mxu0 0.0
    %392 = vmatprep.subr.mxu0 0.0
    %393 = vmatpush2.msra.mxu0 0.0
    %394 = vmatprep.subr.mxu0 0.0
    %395 = vmatpush2.msra.mxu0 0.0
    %396 = vmatprep.subr.mxu0 0.0
    %397 = vmatpush2.msra.mxu0 0.0
    %398 = vmatprep.mubr.f32.mxu0 0.0
    %399 = vmatmul.mubr.f32.gmra.mxu0 %v261
    %v400 = vpop.f32.mrf.mxu0
    %v401 = vadd.f32 0.0, %v400
    %v402 = vpop.f32.mrf.mxu0
    %v403 = vadd.f32 0.0, %v402
    %404 = vdwg.mxu0
    %v405 = vadd.f32 %v184, %v330
    %v406 = vadd.f32 %v186, %v332
    %v407 = vadd.f32 %v255, %v401
    %v408 = vadd.f32 %v257, %v403
    %v409 = vxor.u32 %v405, 2147483648
    %v410 = vxor.u32 %v406, 2147483648
    %v411 = vxor.u32 %v407, 2147483648
    %v412 = vxor.u32 %v408, 2147483648
    %v413 = vmul.f32 %v409, 1.442695
    %v414 = vpow.pop %v413
    %v415 = vmul.f32 %v410, 1.442695
    %v416 = vpow.pop %v415
    %v417 = vmul.f32 %v411, 1.442695
    %v418 = vpow.pop %v417
    %v419 = vmul.f32 %v412, 1.442695
    %v420 = vpow.pop %v419
    %v421 = vadd.f32 %v414, 1.0
    %v422 = vadd.f32 %v416, 1.0
    %v423 = vadd.f32 %v418, 1.0
    %v424 = vadd.f32 %v420, 1.0
    %v425 = vrcp.pop %v421
    %v426 = vmul.f32 1.0, %v425
    %v427 = vrcp.pop %v422
    %v428 = vmul.f32 1.0, %v427
    %v429 = vrcp.pop %v423
    %v430 = vmul.f32 1.0, %v429
    %v431 = vrcp.pop %v424
    %v432 = vmul.f32 1.0, %v431
    %v433 = vmul.f32 %v430, 2.0
    %v434 = vsub.f32 %v433, 1.0
    %v435 = vmul.f32 %v428, %v77
    %v436 = vmul.f32 %v426, %v434
    %v437 = vadd.f32 %v435, %v436
    %v438 = vtanh.pop %v437
    %v439 = vmul.f32 %v432, %v438
    %v441 = vsel %vm259, %v439, 0
    %443 = vmatprep.subr.mxu0 0.0
    %444 = vmatpush1.msra.mxu0 0.0
    %445 = vmatprep.subr.mxu0 0.0
    %446 = vmatpush1.msra.mxu0 0.0
    %447 = vmatprep.subr.mxu0 0.0
    %448 = vmatpush1.msra.mxu0 0.0
    %449 = vmatprep.subr.mxu0 0.0
    %450 = vmatpush1.msra.mxu0 0.0
    %451 = vmatprep.subr.mxu0 0.0
    %452 = vmatpush1.msra.mxu0 0.0
    %453 = vmatprep.subr.mxu0 0.0
    %454 = vmatpush1.msra.mxu0 0.0
    %455 = vmatprep.subr.mxu0 0.0
    %456 = vmatpush1.msra.mxu0 0.0
    %457 = vmatprep.subr.mxu0 0.0
    %458 = vmatpush1.msra.mxu0 0.0
    %459 = vmatprep.subr.mxu0 0.0
    %460 = vmatpush1.msra.mxu0 0.0
    %461 = vmatprep.subr.mxu0 0.0
    %462 = vmatpush1.msra.mxu0 0.0
    %463 = vmatprep.subr.mxu0 0.0
    %464 = vmatpush1.msra.mxu0 0.0
    %465 = vmatprep.subr.mxu0 0.0
    %466 = vmatpush1.msra.mxu0 0.0
    %467 = vmatprep.subr.mxu0 0.0
    %468 = vmatpush1.msra.mxu0 0.0
    %469 = vmatprep.subr.mxu0 0.0
    %470 = vmatpush1.msra.mxu0 0.0
    %471 = vmatprep.subr.mxu0 %v71
    %472 = vmatpush1.msra.mxu0 %v70
    %473 = vmatprep.subr.mxu0 %v67
    %474 = vmatpush1.msra.mxu0 %v66
    %475 = vmatprep.subr.mxu0 0.0
    %476 = vmatpush2.msra.mxu0 0.0
    %477 = vmatprep.subr.mxu0 0.0
    %478 = vmatpush2.msra.mxu0 0.0
    %479 = vmatprep.subr.mxu0 0.0
    %480 = vmatpush2.msra.mxu0 0.0
    %481 = vmatprep.subr.mxu0 0.0
    %482 = vmatpush2.msra.mxu0 0.0
    %483 = vmatprep.subr.mxu0 0.0
    %484 = vmatpush2.msra.mxu0 0.0
    %485 = vmatprep.subr.mxu0 0.0
    %486 = vmatpush2.msra.mxu0 0.0
    %487 = vmatprep.subr.mxu0 0.0
    %488 = vmatpush2.msra.mxu0 0.0
    %489 = vmatprep.subr.mxu0 0.0
    %490 = vmatpush2.msra.mxu0 0.0
    %491 = vmatprep.subr.mxu0 0.0
    %492 = vmatpush2.msra.mxu0 0.0
    %493 = vmatprep.subr.mxu0 0.0
    %494 = vmatpush2.msra.mxu0 0.0
    %495 = vmatprep.subr.mxu0 0.0
    %496 = vmatpush2.msra.mxu0 0.0
    %497 = vmatprep.subr.mxu0 0.0
    %498 = vmatpush2.msra.mxu0 0.0
    %499 = vmatprep.subr.mxu0 0.0
    %500 = vmatpush2.msra.mxu0 0.0
    %501 = vmatprep.subr.mxu0 0.0
    %502 = vmatpush2.msra.mxu0 0.0
    %503 = vmatprep.subr.mxu0 0.0
    %504 = vmatpush2.msra.mxu0 0.0
    %505 = vmatprep.subr.mxu0 0.0
    %506 = vmatpush2.msra.mxu0 0.0
    %507 = vmatprep.mubr.f32.mxu0 0.0
    %508 = vmatmul.mubr.f32.gmra.mxu0 %v441
    %v509 = vpop.f32.mrf.mxu0
    %v510 = vadd.f32 0.0, %v509
    %v511 = vpop.f32.mrf.mxu0
    %v512 = vadd.f32 0.0, %v511
    %513 = vdwg.mxu0
    %514 = vmatprep.subr.mxu0 0.0
    %515 = vmatpush1.msra.mxu0 0.0
    %516 = vmatprep.subr.mxu0 0.0
    %517 = vmatpush1.msra.mxu0 0.0
    %518 = vmatprep.subr.mxu0 0.0
    %519 = vmatpush1.msra.mxu0 0.0
    %520 = vmatprep.subr.mxu0 0.0
    %521 = vmatpush1.msra.mxu0 0.0
    %522 = vmatprep.subr.mxu0 0.0
    %523 = vmatpush1.msra.mxu0 0.0
    %524 = vmatprep.subr.mxu0 0.0
    %525 = vmatpush1.msra.mxu0 0.0
    %526 = vmatprep.subr.mxu0 0.0
    %527 = vmatpush1.msra.mxu0 0.0
    %528 = vmatprep.subr.mxu0 0.0
    %529 = vmatpush1.msra.mxu0 0.0
    %530 = vmatprep.subr.mxu0 0.0
    %531 = vmatpush1.msra.mxu0 0.0
    %532 = vmatprep.subr.mxu0 0.0
    %533 = vmatpush1.msra.mxu0 0.0
    %534 = vmatprep.subr.mxu0 0.0
    %535 = vmatpush1.msra.mxu0 0.0
    %536 = vmatprep.subr.mxu0 0.0
    %537 = vmatpush1.msra.mxu0 0.0
    %538 = vmatprep.subr.mxu0 0.0
    %539 = vmatpush1.msra.mxu0 0.0
    %540 = vmatprep.subr.mxu0 0.0
    %541 = vmatpush1.msra.mxu0 0.0
    %542 = vmatprep.subr.mxu0 %v73
    %543 = vmatpush1.msra.mxu0 %v72
    %544 = vmatprep.subr.mxu0 %v69
    %545 = vmatpush1.msra.mxu0 %v68
    %546 = vmatprep.subr.mxu0 0.0
    %547 = vmatpush2.msra.mxu0 0.0
    %548 = vmatprep.subr.mxu0 0.0
    %549 = vmatpush2.msra.mxu0 0.0
    %550 = vmatprep.subr.mxu0 0.0
    %551 = vmatpush2.msra.mxu0 0.0
    %552 = vmatprep.subr.mxu0 0.0
    %553 = vmatpush2.msra.mxu0 0.0
    %554 = vmatprep.subr.mxu0 0.0
    %555 = vmatpush2.msra.mxu0 0.0
    %556 = vmatprep.subr.mxu0 0.0
    %557 = vmatpush2.msra.mxu0 0.0
    %558 = vmatprep.subr.mxu0 0.0
    %559 = vmatpush2.msra.mxu0 0.0
    %560 = vmatprep.subr.mxu0 0.0
    %561 = vmatpush2.msra.mxu0 0.0
    %562 = vmatprep.subr.mxu0 0.0
    %563 = vmatpush2.msra.mxu0 0.0
    %564 = vmatprep.subr.mxu0 0.0
    %565 = vmatpush2.msra.mxu0 0.0
    %566 = vmatprep.subr.mxu0 0.0
    %567 = vmatpush2.msra.mxu0 0.0
    %568 = vmatprep.subr.mxu0 0.0
    %569 = vmatpush2.msra.mxu0 0.0
    %570 = vmatprep.subr.mxu0 0.0
    %571 = vmatpush2.msra.mxu0 0.0
    %572 = vmatprep.subr.mxu0 0.0
    %573 = vmatpush2.msra.mxu0 0.0
    %574 = vmatprep.subr.mxu0 0.0
    %575 = vmatpush2.msra.mxu0 0.0
    %576 = vmatprep.subr.mxu0 0.0
    %577 = vmatpush2.msra.mxu0 0.0
    %578 = vmatprep.mubr.f32.mxu0 0.0
    %579 = vmatmul.mubr.f32.gmra.mxu0 %v441
    %v580 = vpop.f32.mrf.mxu0
    %v581 = vadd.f32 0.0, %v580
    %v582 = vpop.f32.mrf.mxu0
    %v583 = vadd.f32 0.0, %v582
    %584 = vdwg.mxu0
    %v589 = vrot.slane %v510, 7
    %v590 = vrot.slane %v512, 7
    %v591 = vrot.slane %v581, 7
    %v592 = vrot.slane %v583, 7
    %v597 = vadd.f32 %v184, %v589
    %v598 = vadd.f32 %v186, %v590
    %v599 = vadd.f32 %v255, %v591
    %v600 = vadd.f32 %v257, %v592
    %v601 = vxor.u32 %v597, 2147483648
    %v602 = vxor.u32 %v598, 2147483648
    %v603 = vxor.u32 %v599, 2147483648
    %v604 = vxor.u32 %v600, 2147483648
    %v605 = vmul.f32 %v601, 1.442695
    %v606 = vpow.pop %v605
    %v607 = vmul.f32 %v602, 1.442695
    %v608 = vpow.pop %v607
    %v609 = vmul.f32 %v603, 1.442695
    %v610 = vpow.pop %v609
    %v611 = vmul.f32 %v604, 1.442695
    %v612 = vpow.pop %v611
    %v613 = vadd.f32 %v606, 1.0
    %v614 = vadd.f32 %v608, 1.0
    %v615 = vadd.f32 %v610, 1.0
    %v616 = vadd.f32 %v612, 1.0
    %v617 = vrcp.pop %v613
    %v618 = vmul.f32 1.0, %v617
    %v619 = vrcp.pop %v614
    %v620 = vmul.f32 1.0, %v619
    %v621 = vrcp.pop %v615
    %v622 = vmul.f32 1.0, %v621
    %v623 = vrcp.pop %v616
    %v624 = vmul.f32 1.0, %v623
    %v625 = vmul.f32 %v622, 2.0
    %v626 = vsub.f32 %v625, 1.0
    %v628 = vrot.slane %v437, 7
    %v630 = vmul.f32 %v620, %v628
    %v631 = vmul.f32 %v618, %v626
    %v632 = vadd.f32 %v630, %v631
    %v633 = vtanh.pop %v632
    %v634 = vmul.f32 %v624, %v633
    %v636 = vrot.slane %v634, 1
    %v637 = vsel %vm259, %v636, 0
    %639 = vmatprep.subr.mxu0 0.0
    %640 = vmatpush1.msra.mxu0 0.0
    %641 = vmatprep.subr.mxu0 0.0
    %642 = vmatpush1.msra.mxu0 0.0
    %643 = vmatprep.subr.mxu0 0.0
    %644 = vmatpush1.msra.mxu0 0.0
    %645 = vmatprep.subr.mxu0 0.0
    %646 = vmatpush1.msra.mxu0 0.0
    %647 = vmatprep.subr.mxu0 0.0
    %648 = vmatpush1.msra.mxu0 0.0
    %649 = vmatprep.subr.mxu0 0.0
    %650 = vmatpush1.msra.mxu0 0.0
    %651 = vmatprep.subr.mxu0 0.0
    %652 = vmatpush1.msra.mxu0 0.0
    %653 = vmatprep.subr.mxu0 0.0
    %654 = vmatpush1.msra.mxu0 0.0
    %655 = vmatprep.subr.mxu0 0.0
    %656 = vmatpush1.msra.mxu0 0.0
    %657 = vmatprep.subr.mxu0 0.0
    %658 = vmatpush1.msra.mxu0 0.0
    %659 = vmatprep.subr.mxu0 0.0
    %660 = vmatpush1.msra.mxu0 0.0
    %661 = vmatprep.subr.mxu0 0.0
    %662 = vmatpush1.msra.mxu0 0.0
    %663 = vmatprep.subr.mxu0 0.0
    %664 = vmatpush1.msra.mxu0 0.0
    %665 = vmatprep.subr.mxu0 0.0
    %666 = vmatpush1.msra.mxu0 0.0
    %667 = vmatprep.subr.mxu0 %v71
    %668 = vmatpush1.msra.mxu0 %v70
    %669 = vmatprep.subr.mxu0 %v67
    %670 = vmatpush1.msra.mxu0 %v66
    %671 = vmatprep.subr.mxu0 0.0
    %672 = vmatpush2.msra.mxu0 0.0
    %673 = vmatprep.subr.mxu0 0.0
    %674 = vmatpush2.msra.mxu0 0.0
    %675 = vmatprep.subr.mxu0 0.0
    %676 = vmatpush2.msra.mxu0 0.0
    %677 = vmatprep.subr.mxu0 0.0
    %678 = vmatpush2.msra.mxu0 0.0
    %679 = vmatprep.subr.mxu0 0.0
    %680 = vmatpush2.msra.mxu0 0.0
    %681 = vmatprep.subr.mxu0 0.0
    %682 = vmatpush2.msra.mxu0 0.0
    %683 = vmatprep.subr.mxu0 0.0
    %684 = vmatpush2.msra.mxu0 0.0
    %685 = vmatprep.subr.mxu0 0.0
    %686 = vmatpush2.msra.mxu0 0.0
    %687 = vmatprep.subr.mxu0 0.0
    %688 = vmatpush2.msra.mxu0 0.0
    %689 = vmatprep.subr.mxu0 0.0
    %690 = vmatpush2.msra.mxu0 0.0
    %691 = vmatprep.subr.mxu0 0.0
    %692 = vmatpush2.msra.mxu0 0.0
    %693 = vmatprep.subr.mxu0 0.0
    %694 = vmatpush2.msra.mxu0 0.0
    %695 = vmatprep.subr.mxu0 0.0
    %696 = vmatpush2.msra.mxu0 0.0
    %697 = vmatprep.subr.mxu0 0.0
    %698 = vmatpush2.msra.mxu0 0.0
    %699 = vmatprep.subr.mxu0 0.0
    %700 = vmatpush2.msra.mxu0 0.0
    %701 = vmatprep.subr.mxu0 0.0
    %702 = vmatpush2.msra.mxu0 0.0
    %703 = vmatprep.mubr.f32.mxu0 0.0
    %704 = vmatmul.mubr.f32.gmra.mxu0 %v637
    %v705 = vpop.f32.mrf.mxu0
    %v706 = vadd.f32 0.0, %v705
    %v707 = vpop.f32.mrf.mxu0
    %v708 = vadd.f32 0.0, %v707
    %709 = vdwg.mxu0
    %710 = vmatprep.subr.mxu0 0.0
    %711 = vmatpush1.msra.mxu0 0.0
    %712 = vmatprep.subr.mxu0 0.0
    %713 = vmatpush1.msra.mxu0 0.0
    %714 = vmatprep.subr.mxu0 0.0
    %715 = vmatpush1.msra.mxu0 0.0
    %716 = vmatprep.subr.mxu0 0.0
    %717 = vmatpush1.msra.mxu0 0.0
    %718 = vmatprep.subr.mxu0 0.0
    %719 = vmatpush1.msra.mxu0 0.0
    %720 = vmatprep.subr.mxu0 0.0
    %721 = vmatpush1.msra.mxu0 0.0
    %722 = vmatprep.subr.mxu0 0.0
    %723 = vmatpush1.msra.mxu0 0.0
    %724 = vmatprep.subr.mxu0 0.0
    %725 = vmatpush1.msra.mxu0 0.0
    %726 = vmatprep.subr.mxu0 0.0
    %727 = vmatpush1.msra.mxu0 0.0
    %728 = vmatprep.subr.mxu0 0.0
    %729 = vmatpush1.msra.mxu0 0.0
    %730 = vmatprep.subr.mxu0 0.0
    %731 = vmatpush1.msra.mxu0 0.0
    %732 = vmatprep.subr.mxu0 0.0
    %733 = vmatpush1.msra.mxu0 0.0
    %734 = vmatprep.subr.mxu0 0.0
    %735 = vmatpush1.msra.mxu0 0.0
    %736 = vmatprep.subr.mxu0 0.0
    %737 = vmatpush1.msra.mxu0 0.0
    %738 = vmatprep.subr.mxu0 %v73
    %739 = vmatpush1.msra.mxu0 %v72
    %740 = vmatprep.subr.mxu0 %v69
    %741 = vmatpush1.msra.mxu0 %v68
    %742 = vmatprep.subr.mxu0 0.0
    %743 = vmatpush2.msra.mxu0 0.0
    %744 = vmatprep.subr.mxu0 0.0
    %745 = vmatpush2.msra.mxu0 0.0
    %746 = vmatprep.subr.mxu0 0.0
    %747 = vmatpush2.msra.mxu0 0.0
    %748 = vmatprep.subr.mxu0 0.0
    %749 = vmatpush2.msra.mxu0 0.0
    %750 = vmatprep.subr.mxu0 0.0
    %751 = vmatpush2.msra.mxu0 0.0
    %752 = vmatprep.subr.mxu0 0.0
    %753 = vmatpush2.msra.mxu0 0.0
    %754 = vmatprep.subr.mxu0 0.0
    %755 = vmatpush2.msra.mxu0 0.0
    %756 = vmatprep.subr.mxu0 0.0
    %757 = vmatpush2.msra.mxu0 0.0
    %758 = vmatprep.subr.mxu0 0.0
    %759 = vmatpush2.msra.mxu0 0.0
    %760 = vmatprep.subr.mxu0 0.0
    %761 = vmatpush2.msra.mxu0 0.0
    %762 = vmatprep.subr.mxu0 0.0
    %763 = vmatpush2.msra.mxu0 0.0
    %764 = vmatprep.subr.mxu0 0.0
    %765 = vmatpush2.msra.mxu0 0.0
    %766 = vmatprep.subr.mxu0 0.0
    %767 = vmatpush2.msra.mxu0 0.0
    %768 = vmatprep.subr.mxu0 0.0
    %769 = vmatpush2.msra.mxu0 0.0
    %770 = vmatprep.subr.mxu0 0.0
    %771 = vmatpush2.msra.mxu0 0.0
    %772 = vmatprep.subr.mxu0 0.0
    %773 = vmatpush2.msra.mxu0 0.0
    %774 = vmatprep.mubr.f32.mxu0 0.0
    %775 = vmatmul.mubr.f32.gmra.mxu0 %v637
    %v776 = vpop.f32.mrf.mxu0
    %v777 = vadd.f32 0.0, %v776
    %v778 = vpop.f32.mrf.mxu0
    %v779 = vadd.f32 0.0, %v778
    %780 = vdwg.mxu0
    %v785 = vrot.slane %v706, 6
    %v786 = vrot.slane %v708, 6
    %v787 = vrot.slane %v777, 6
    %v788 = vrot.slane %v779, 6
    %v793 = vadd.f32 %v184, %v785
    %v794 = vadd.f32 %v186, %v786
    %v795 = vadd.f32 %v255, %v787
    %v796 = vadd.f32 %v257, %v788
    %v797 = vxor.u32 %v793, 2147483648
    %v798 = vxor.u32 %v794, 2147483648
    %v799 = vxor.u32 %v795, 2147483648
    %v800 = vxor.u32 %v796, 2147483648
    %v801 = vmul.f32 %v797, 1.442695
    %v802 = vpow.pop %v801
    %v803 = vmul.f32 %v798, 1.442695
    %v804 = vpow.pop %v803
    %v805 = vmul.f32 %v799, 1.442695
    %v806 = vpow.pop %v805
    %v807 = vmul.f32 %v800, 1.442695
    %v808 = vpow.pop %v807
    %v809 = vadd.f32 %v802, 1.0
    %v810 = vadd.f32 %v804, 1.0
    %v811 = vadd.f32 %v806, 1.0
    %v812 = vadd.f32 %v808, 1.0
    %v813 = vrcp.pop %v809
    %v814 = vmul.f32 1.0, %v813
    %v815 = vrcp.pop %v810
    %v816 = vmul.f32 1.0, %v815
    %v817 = vrcp.pop %v811
    %v818 = vmul.f32 1.0, %v817
    %v819 = vrcp.pop %v812
    %v820 = vmul.f32 1.0, %v819
    %v821 = vmul.f32 %v818, 2.0
    %v822 = vsub.f32 %v821, 1.0
    %v824 = vrot.slane %v632, 7
    %v826 = vmul.f32 %v816, %v824
    %v827 = vmul.f32 %v814, %v822
    %v828 = vadd.f32 %v826, %v827
    %v829 = vtanh.pop %v828
    %v830 = vmul.f32 %v820, %v829
    %v832 = vrot.slane %v830, 2
    %v833 = vsel %vm259, %v832, 0
    %835 = vmatprep.subr.mxu0 0.0
    %836 = vmatpush1.msra.mxu0 0.0
    %837 = vmatprep.subr.mxu0 0.0
    %838 = vmatpush1.msra.mxu0 0.0
    %839 = vmatprep.subr.mxu0 0.0
    %840 = vmatpush1.msra.mxu0 0.0
    %841 = vmatprep.subr.mxu0 0.0
    %842 = vmatpush1.msra.mxu0 0.0
    %843 = vmatprep.subr.mxu0 0.0
    %844 = vmatpush1.msra.mxu0 0.0
    %845 = vmatprep.subr.mxu0 0.0
    %846 = vmatpush1.msra.mxu0 0.0
    %847 = vmatprep.subr.mxu0 0.0
    %848 = vmatpush1.msra.mxu0 0.0
    %849 = vmatprep.subr.mxu0 0.0
    %850 = vmatpush1.msra.mxu0 0.0
    %851 = vmatprep.subr.mxu0 0.0
    %852 = vmatpush1.msra.mxu0 0.0
    %853 = vmatprep.subr.mxu0 0.0
    %854 = vmatpush1.msra.mxu0 0.0
    %855 = vmatprep.subr.mxu0 0.0
    %856 = vmatpush1.msra.mxu0 0.0
    %857 = vmatprep.subr.mxu0 0.0
    %858 = vmatpush1.msra.mxu0 0.0
    %859 = vmatprep.subr.mxu0 0.0
    %860 = vmatpush1.msra.mxu0 0.0
    %861 = vmatprep.subr.mxu0 0.0
    %862 = vmatpush1.msra.mxu0 0.0
    %863 = vmatprep.subr.mxu0 %v71
    %864 = vmatpush1.msra.mxu0 %v70
    %865 = vmatprep.subr.mxu0 %v67
    %866 = vmatpush1.msra.mxu0 %v66
    %867 = vmatprep.subr.mxu0 0.0
    %868 = vmatpush2.msra.mxu0 0.0
    %869 = vmatprep.subr.mxu0 0.0
    %870 = vmatpush2.msra.mxu0 0.0
    %871 = vmatprep.subr.mxu0 0.0
    %872 = vmatpush2.msra.mxu0 0.0
    %873 = vmatprep.subr.mxu0 0.0
    %874 = vmatpush2.msra.mxu0 0.0
    %875 = vmatprep.subr.mxu0 0.0
    %876 = vmatpush2.msra.mxu0 0.0
    %877 = vmatprep.subr.mxu0 0.0
    %878 = vmatpush2.msra.mxu0 0.0
    %879 = vmatprep.subr.mxu0 0.0
    %880 = vmatpush2.msra.mxu0 0.0
    %881 = vmatprep.subr.mxu0 0.0
    %882 = vmatpush2.msra.mxu0 0.0
    %883 = vmatprep.subr.mxu0 0.0
    %884 = vmatpush2.msra.mxu0 0.0
    %885 = vmatprep.subr.mxu0 0.0
    %886 = vmatpush2.msra.mxu0 0.0
    %887 = vmatprep.subr.mxu0 0.0
    %888 = vmatpush2.msra.mxu0 0.0
    %889 = vmatprep.subr.mxu0 0.0
    %890 = vmatpush2.msra.mxu0 0.0
    %891 = vmatprep.subr.mxu0 0.0
    %892 = vmatpush2.msra.mxu0 0.0
    %893 = vmatprep.subr.mxu0 0.0
    %894 = vmatpush2.msra.mxu0 0.0
    %895 = vmatprep.subr.mxu0 0.0
    %896 = vmatpush2.msra.mxu0 0.0
    %897 = vmatprep.subr.mxu0 0.0
    %898 = vmatpush2.msra.mxu0 0.0
    %899 = vmatprep.mubr.f32.mxu0 0.0
    %900 = vmatmul.mubr.f32.gmra.mxu0 %v833
    %v901 = vpop.f32.mrf.mxu0
    %v902 = vadd.f32 0.0, %v901
    %v903 = vpop.f32.mrf.mxu0
    %v904 = vadd.f32 0.0, %v903
    %905 = vdwg.mxu0
    %906 = vmatprep.subr.mxu0 0.0
    %907 = vmatpush1.msra.mxu0 0.0
    %908 = vmatprep.subr.mxu0 0.0
    %909 = vmatpush1.msra.mxu0 0.0
    %910 = vmatprep.subr.mxu0 0.0
    %911 = vmatpush1.msra.mxu0 0.0
    %912 = vmatprep.subr.mxu0 0.0
    %913 = vmatpush1.msra.mxu0 0.0
    %914 = vmatprep.subr.mxu0 0.0
    %915 = vmatpush1.msra.mxu0 0.0
    %916 = vmatprep.subr.mxu0 0.0
    %917 = vmatpush1.msra.mxu0 0.0
    %918 = vmatprep.subr.mxu0 0.0
    %919 = vmatpush1.msra.mxu0 0.0
    %920 = vmatprep.subr.mxu0 0.0
    %921 = vmatpush1.msra.mxu0 0.0
    %922 = vmatprep.subr.mxu0 0.0
    %923 = vmatpush1.msra.mxu0 0.0
    %924 = vmatprep.subr.mxu0 0.0
    %925 = vmatpush1.msra.mxu0 0.0
    %926 = vmatprep.subr.mxu0 0.0
    %927 = vmatpush1.msra.mxu0 0.0
    %928 = vmatprep.subr.mxu0 0.0
    %929 = vmatpush1.msra.mxu0 0.0
    %930 = vmatprep.subr.mxu0 0.0
    %931 = vmatpush1.msra.mxu0 0.0
    %932 = vmatprep.subr.mxu0 0.0
    %933 = vmatpush1.msra.mxu0 0.0
    %934 = vmatprep.subr.mxu0 %v73
    %935 = vmatpush1.msra.mxu0 %v72
    %936 = vmatprep.subr.mxu0 %v69
    %937 = vmatpush1.msra.mxu0 %v68
    %938 = vmatprep.subr.mxu0 0.0
    %939 = vmatpush2.msra.mxu0 0.0
    %940 = vmatprep.subr.mxu0 0.0
    %941 = vmatpush2.msra.mxu0 0.0
    %942 = vmatprep.subr.mxu0 0.0
    %943 = vmatpush2.msra.mxu0 0.0
    %944 = vmatprep.subr.mxu0 0.0
    %945 = vmatpush2.msra.mxu0 0.0
    %946 = vmatprep.subr.mxu0 0.0
    %947 = vmatpush2.msra.mxu0 0.0
    %948 = vmatprep.subr.mxu0 0.0
    %949 = vmatpush2.msra.mxu0 0.0
    %950 = vmatprep.subr.mxu0 0.0
    %951 = vmatpush2.msra.mxu0 0.0
    %952 = vmatprep.subr.mxu0 0.0
    %953 = vmatpush2.msra.mxu0 0.0
    %954 = vmatprep.subr.mxu0 0.0
    %955 = vmatpush2.msra.mxu0 0.0
    %956 = vmatprep.subr.mxu0 0.0
    %957 = vmatpush2.msra.mxu0 0.0
    %958 = vmatprep.subr.mxu0 0.0
    %959 = vmatpush2.msra.mxu0 0.0
    %960 = vmatprep.subr.mxu0 0.0
    %961 = vmatpush2.msra.mxu0 0.0
    %962 = vmatprep.subr.mxu0 0.0
    %963 = vmatpush2.msra.mxu0 0.0
    %964 = vmatprep.subr.mxu0 0.0
    %965 = vmatpush2.msra.mxu0 0.0
    %966 = vmatprep.subr.mxu0 0.0
    %967 = vmatpush2.msra.mxu0 0.0
    %968 = vmatprep.subr.mxu0 0.0
    %969 = vmatpush2.msra.mxu0 0.0
    %970 = vmatprep.mubr.f32.mxu0 0.0
    %971 = vmatmul.mubr.f32.gmra.mxu0 %v833
    %v972 = vpop.f32.mrf.mxu0
    %v973 = vadd.f32 0.0, %v972
    %v974 = vpop.f32.mrf.mxu0
    %v975 = vadd.f32 0.0, %v974
    %976 = vdwg.mxu0
    %v981 = vrot.slane %v902, 5
    %v982 = vrot.slane %v904, 5
    %v983 = vrot.slane %v973, 5
    %v984 = vrot.slane %v975, 5
    %v989 = vadd.f32 %v184, %v981
    %v990 = vadd.f32 %v186, %v982
    %v991 = vadd.f32 %v255, %v983
    %v992 = vadd.f32 %v257, %v984
    %v993 = vxor.u32 %v989, 2147483648
    %v994 = vxor.u32 %v990, 2147483648
    %v995 = vxor.u32 %v991, 2147483648
    %v996 = vxor.u32 %v992, 2147483648
    %v997 = vmul.f32 %v993, 1.442695
    %v998 = vpow.pop %v997
    %v999 = vmul.f32 %v994, 1.442695
    %v1000 = vpow.pop %v999
    %v1001 = vmul.f32 %v995, 1.442695
    %v1002 = vpow.pop %v1001
    %v1003 = vmul.f32 %v996, 1.442695
    %v1004 = vpow.pop %v1003
    %v1005 = vadd.f32 %v998, 1.0
    %v1006 = vadd.f32 %v1000, 1.0
    %v1007 = vadd.f32 %v1002, 1.0
    %v1008 = vadd.f32 %v1004, 1.0
    %v1009 = vrcp.pop %v1005
    %v1010 = vmul.f32 1.0, %v1009
    %v1011 = vrcp.pop %v1006
    %v1012 = vmul.f32 1.0, %v1011
    %v1013 = vrcp.pop %v1007
    %v1014 = vmul.f32 1.0, %v1013
    %v1015 = vrcp.pop %v1008
    %v1016 = vmul.f32 1.0, %v1015
    %v1017 = vmul.f32 %v1014, 2.0
    %v1018 = vsub.f32 %v1017, 1.0
    %v1020 = vrot.slane %v828, 7
    %v1022 = vmul.f32 %v1012, %v1020
    %v1023 = vmul.f32 %v1010, %v1018
    %v1024 = vadd.f32 %v1022, %v1023
    %v1025 = vtanh.pop %v1024
    %v1026 = vmul.f32 %v1016, %v1025
    %v1028 = vrot.slane %v1026, 3
    %v1029 = vsel %vm259, %v1028, 0
    %1031 = vmatprep.subr.mxu0 0.0
    %1032 = vmatpush1.msra.mxu0 0.0
    %1033 = vmatprep.subr.mxu0 0.0
    %1034 = vmatpush1.msra.mxu0 0.0
    %1035 = vmatprep.subr.mxu0 0.0
    %1036 = vmatpush1.msra.mxu0 0.0
    %1037 = vmatprep.subr.mxu0 0.0
    %1038 = vmatpush1.msra.mxu0 0.0
    %1039 = vmatprep.subr.mxu0 0.0
    %1040 = vmatpush1.msra.mxu0 0.0
    %1041 = vmatprep.subr.mxu0 0.0
    %1042 = vmatpush1.msra.mxu0 0.0
    %1043 = vmatprep.subr.mxu0 0.0
    %1044 = vmatpush1.msra.mxu0 0.0
    %1045 = vmatprep.subr.mxu0 0.0
    %1046 = vmatpush1.msra.mxu0 0.0
    %1047 = vmatprep.subr.mxu0 0.0
    %1048 = vmatpush1.msra.mxu0 0.0
    %1049 = vmatprep.subr.mxu0 0.0
    %1050 = vmatpush1.msra.mxu0 0.0
    %1051 = vmatprep.subr.mxu0 0.0
    %1052 = vmatpush1.msra.mxu0 0.0
    %1053 = vmatprep.subr.mxu0 0.0
    %1054 = vmatpush1.msra.mxu0 0.0
    %1055 = vmatprep.subr.mxu0 0.0
    %1056 = vmatpush1.msra.mxu0 0.0
    %1057 = vmatprep.subr.mxu0 0.0
    %1058 = vmatpush1.msra.mxu0 0.0
    %1059 = vmatprep.subr.mxu0 %v71
    %1060 = vmatpush1.msra.mxu0 %v70
    %1061 = vmatprep.subr.mxu0 %v67
    %1062 = vmatpush1.msra.mxu0 %v66
    %1063 = vmatprep.subr.mxu0 0.0
    %1064 = vmatpush2.msra.mxu0 0.0
    %1065 = vmatprep.subr.mxu0 0.0
    %1066 = vmatpush2.msra.mxu0 0.0
    %1067 = vmatprep.subr.mxu0 0.0
    %1068 = vmatpush2.msra.mxu0 0.0
    %1069 = vmatprep.subr.mxu0 0.0
    %1070 = vmatpush2.msra.mxu0 0.0
    %1071 = vmatprep.subr.mxu0 0.0
    %1072 = vmatpush2.msra.mxu0 0.0
    %1073 = vmatprep.subr.mxu0 0.0
    %1074 = vmatpush2.msra.mxu0 0.0
    %1075 = vmatprep.subr.mxu0 0.0
    %1076 = vmatpush2.msra.mxu0 0.0
    %1077 = vmatprep.subr.mxu0 0.0
    %1078 = vmatpush2.msra.mxu0 0.0
    %1079 = vmatprep.subr.mxu0 0.0
    %1080 = vmatpush2.msra.mxu0 0.0
    %1081 = vmatprep.subr.mxu0 0.0
    %1082 = vmatpush2.msra.mxu0 0.0
    %1083 = vmatprep.subr.mxu0 0.0
    %1084 = vmatpush2.msra.mxu0 0.0
    %1085 = vmatprep.subr.mxu0 0.0
    %1086 = vmatpush2.msra.mxu0 0.0
    %1087 = vmatprep.subr.mxu0 0.0
    %1088 = vmatpush2.msra.mxu0 0.0
    %1089 = vmatprep.subr.mxu0 0.0
    %1090 = vmatpush2.msra.mxu0 0.0
    %1091 = vmatprep.subr.mxu0 0.0
    %1092 = vmatpush2.msra.mxu0 0.0
    %1093 = vmatprep.subr.mxu0 0.0
    %1094 = vmatpush2.msra.mxu0 0.0
    %1095 = vmatprep.mubr.f32.mxu0 0.0
    %1096 = vmatmul.mubr.f32.gmra.mxu0 %v1029
    %v1097 = vpop.f32.mrf.mxu0
    %v1098 = vadd.f32 0.0, %v1097
    %v1099 = vpop.f32.mrf.mxu0
    %v1100 = vadd.f32 0.0, %v1099
    %1101 = vdwg.mxu0
    %1102 = vmatprep.subr.mxu0 0.0
    %1103 = vmatpush1.msra.mxu0 0.0
    %1104 = vmatprep.subr.mxu0 0.0
    %1105 = vmatpush1.msra.mxu0 0.0
    %1106 = vmatprep.subr.mxu0 0.0
    %1107 = vmatpush1.msra.mxu0 0.0
    %1108 = vmatprep.subr.mxu0 0.0
    %1109 = vmatpush1.msra.mxu0 0.0
    %1110 = vmatprep.subr.mxu0 0.0
    %1111 = vmatpush1.msra.mxu0 0.0
    %1112 = vmatprep.subr.mxu0 0.0
    %1113 = vmatpush1.msra.mxu0 0.0
    %1114 = vmatprep.subr.mxu0 0.0
    %1115 = vmatpush1.msra.mxu0 0.0
    %1116 = vmatprep.subr.mxu0 0.0
    %1117 = vmatpush1.msra.mxu0 0.0
    %1118 = vmatprep.subr.mxu0 0.0
    %1119 = vmatpush1.msra.mxu0 0.0
    %1120 = vmatprep.subr.mxu0 0.0
    %1121 = vmatpush1.msra.mxu0 0.0
    %1122 = vmatprep.subr.mxu0 0.0
    %1123 = vmatpush1.msra.mxu0 0.0
    %1124 = vmatprep.subr.mxu0 0.0
    %1125 = vmatpush1.msra.mxu0 0.0
    %1126 = vmatprep.subr.mxu0 0.0
    %1127 = vmatpush1.msra.mxu0 0.0
    %1128 = vmatprep.subr.mxu0 0.0
    %1129 = vmatpush1.msra.mxu0 0.0
    %1130 = vmatprep.subr.mxu0 %v73
    %1131 = vmatpush1.msra.mxu0 %v72
    %1132 = vmatprep.subr.mxu0 %v69
    %1133 = vmatpush1.msra.mxu0 %v68
    %1134 = vmatprep.subr.mxu0 0.0
    %1135 = vmatpush2.msra.mxu0 0.0
    %1136 = vmatprep.subr.mxu0 0.0
    %1137 = vmatpush2.msra.mxu0 0.0
    %1138 = vmatprep.subr.mxu0 0.0
    %1139 = vmatpush2.msra.mxu0 0.0
    %1140 = vmatprep.subr.mxu0 0.0
    %1141 = vmatpush2.msra.mxu0 0.0
    %1142 = vmatprep.subr.mxu0 0.0
    %1143 = vmatpush2.msra.mxu0 0.0
    %1144 = vmatprep.subr.mxu0 0.0
    %1145 = vmatpush2.msra.mxu0 0.0
    %1146 = vmatprep.subr.mxu0 0.0
    %1147 = vmatpush2.msra.mxu0 0.0
    %1148 = vmatprep.subr.mxu0 0.0
    %1149 = vmatpush2.msra.mxu0 0.0
    %1150 = vmatprep.subr.mxu0 0.0
    %1151 = vmatpush2.msra.mxu0 0.0
    %1152 = vmatprep.subr.mxu0 0.0
    %1153 = vmatpush2.msra.mxu0 0.0
    %1154 = vmatprep.subr.mxu0 0.0
    %1155 = vmatpush2.msra.mxu0 0.0
    %1156 = vmatprep.subr.mxu0 0.0
    %1157 = vmatpush2.msra.mxu0 0.0
    %1158 = vmatprep.subr.mxu0 0.0
    %1159 = vmatpush2.msra.mxu0 0.0
    %1160 = vmatprep.subr.mxu0 0.0
    %1161 = vmatpush2.msra.mxu0 0.0
    %1162 = vmatprep.subr.mxu0 0.0
    %1163 = vmatpush2.msra.mxu0 0.0
    %1164 = vmatprep.subr.mxu0 0.0
    %1165 = vmatpush2.msra.mxu0 0.0
    %1166 = vmatprep.mubr.f32.mxu0 0.0
    %1167 = vmatmul.mubr.f32.gmra.mxu0 %v1029
    %v1168 = vpop.f32.mrf.mxu0
    %v1169 = vadd.f32 0.0, %v1168
    %v1170 = vpop.f32.mrf.mxu0
    %v1171 = vadd.f32 0.0, %v1170
    %1172 = vdwg.mxu0
    %v1177 = vrot.slane %v1098, 4
    %v1178 = vrot.slane %v1100, 4
    %v1179 = vrot.slane %v1169, 4
    %v1180 = vrot.slane %v1171, 4
    %v1185 = vadd.f32 %v184, %v1177
    %v1186 = vadd.f32 %v186, %v1178
    %v1187 = vadd.f32 %v255, %v1179
    %v1188 = vadd.f32 %v257, %v1180
    %v1189 = vxor.u32 %v1185, 2147483648
    %v1190 = vxor.u32 %v1186, 2147483648
    %v1191 = vxor.u32 %v1187, 2147483648
    %v1192 = vxor.u32 %v1188, 2147483648
    %v1193 = vmul.f32 %v1189, 1.442695
    %v1194 = vpow.pop %v1193
    %v1195 = vmul.f32 %v1190, 1.442695
    %v1196 = vpow.pop %v1195
    %v1197 = vmul.f32 %v1191, 1.442695
    %v1198 = vpow.pop %v1197
    %v1199 = vmul.f32 %v1192, 1.442695
    %v1200 = vpow.pop %v1199
    %v1201 = vadd.f32 %v1194, 1.0
    %v1202 = vadd.f32 %v1196, 1.0
    %v1203 = vadd.f32 %v1198, 1.0
    %v1204 = vadd.f32 %v1200, 1.0
    %v1205 = vrcp.pop %v1201
    %v1206 = vmul.f32 1.0, %v1205
    %v1207 = vrcp.pop %v1202
    %v1208 = vmul.f32 1.0, %v1207
    %v1209 = vrcp.pop %v1203
    %v1210 = vmul.f32 1.0, %v1209
    %v1211 = vrcp.pop %v1204
    %v1212 = vmul.f32 1.0, %v1211
    %v1213 = vmul.f32 %v1210, 2.0
    %v1214 = vsub.f32 %v1213, 1.0
    %v1216 = vrot.slane %v1024, 7
    %v1218 = vmul.f32 %v1208, %v1216
    %v1219 = vmul.f32 %v1206, %v1214
    %v1220 = vadd.f32 %v1218, %v1219
    %v1221 = vtanh.pop %v1220
    %v1222 = vmul.f32 %v1212, %v1221
    %v1224 = vrot.slane %v1222, 4
    %v1225 = vsel %vm259, %v1224, 0
    %1227 = vmatprep.subr.mxu0 0.0
    %1228 = vmatpush1.msra.mxu0 0.0
    %1229 = vmatprep.subr.mxu0 0.0
    %1230 = vmatpush1.msra.mxu0 0.0
    %1231 = vmatprep.subr.mxu0 0.0
    %1232 = vmatpush1.msra.mxu0 0.0
    %1233 = vmatprep.subr.mxu0 0.0
    %1234 = vmatpush1.msra.mxu0 0.0
    %1235 = vmatprep.subr.mxu0 0.0
    %1236 = vmatpush1.msra.mxu0 0.0
    %1237 = vmatprep.subr.mxu0 0.0
    %1238 = vmatpush1.msra.mxu0 0.0
    %1239 = vmatprep.subr.mxu0 0.0
    %1240 = vmatpush1.msra.mxu0 0.0
    %1241 = vmatprep.subr.mxu0 0.0
    %1242 = vmatpush1.msra.mxu0 0.0
    %1243 = vmatprep.subr.mxu0 0.0
    %1244 = vmatpush1.msra.mxu0 0.0
    %1245 = vmatprep.subr.mxu0 0.0
    %1246 = vmatpush1.msra.mxu0 0.0
    %1247 = vmatprep.subr.mxu0 0.0
    %1248 = vmatpush1.msra.mxu0 0.0
    %1249 = vmatprep.subr.mxu0 0.0
    %1250 = vmatpush1.msra.mxu0 0.0
    %1251 = vmatprep.subr.mxu0 0.0
    %1252 = vmatpush1.msra.mxu0 0.0
    %1253 = vmatprep.subr.mxu0 0.0
    %1254 = vmatpush1.msra.mxu0 0.0
    %1255 = vmatprep.subr.mxu0 %v71
    %1256 = vmatpush1.msra.mxu0 %v70
    %1257 = vmatprep.subr.mxu0 %v67
    %1258 = vmatpush1.msra.mxu0 %v66
    %1259 = vmatprep.subr.mxu0 0.0
    %1260 = vmatpush2.msra.mxu0 0.0
    %1261 = vmatprep.subr.mxu0 0.0
    %1262 = vmatpush2.msra.mxu0 0.0
    %1263 = vmatprep.subr.mxu0 0.0
    %1264 = vmatpush2.msra.mxu0 0.0
    %1265 = vmatprep.subr.mxu0 0.0
    %1266 = vmatpush2.msra.mxu0 0.0
    %1267 = vmatprep.subr.mxu0 0.0
    %1268 = vmatpush2.msra.mxu0 0.0
    %1269 = vmatprep.subr.mxu0 0.0
    %1270 = vmatpush2.msra.mxu0 0.0
    %1271 = vmatprep.subr.mxu0 0.0
    %1272 = vmatpush2.msra.mxu0 0.0
    %1273 = vmatprep.subr.mxu0 0.0
    %1274 = vmatpush2.msra.mxu0 0.0
    %1275 = vmatprep.subr.mxu0 0.0
    %1276 = vmatpush2.msra.mxu0 0.0
    %1277 = vmatprep.subr.mxu0 0.0
    %1278 = vmatpush2.msra.mxu0 0.0
    %1279 = vmatprep.subr.mxu0 0.0
    %1280 = vmatpush2.msra.mxu0 0.0
    %1281 = vmatprep.subr.mxu0 0.0
    %1282 = vmatpush2.msra.mxu0 0.0
    %1283 = vmatprep.subr.mxu0 0.0
    %1284 = vmatpush2.msra.mxu0 0.0
    %1285 = vmatprep.subr.mxu0 0.0
    %1286 = vmatpush2.msra.mxu0 0.0
    %1287 = vmatprep.subr.mxu0 0.0
    %1288 = vmatpush2.msra.mxu0 0.0
    %1289 = vmatprep.subr.mxu0 0.0
    %1290 = vmatpush2.msra.mxu0 0.0
    %1291 = vmatprep.mubr.f32.mxu0 0.0
    %1292 = vmatmul.mubr.f32.gmra.mxu0 %v1225
    %v1293 = vpop.f32.mrf.mxu0
    %v1294 = vadd.f32 0.0, %v1293
    %v1295 = vpop.f32.mrf.mxu0
    %v1296 = vadd.f32 0.0, %v1295
    %1297 = vdwg.mxu0
    %1298 = vmatprep.subr.mxu0 0.0
    %1299 = vmatpush1.msra.mxu0 0.0
    %1300 = vmatprep.subr.mxu0 0.0
    %1301 = vmatpush1.msra.mxu0 0.0
    %1302 = vmatprep.subr.mxu0 0.0
    %1303 = vmatpush1.msra.mxu0 0.0
    %1304 = vmatprep.subr.mxu0 0.0
    %1305 = vmatpush1.msra.mxu0 0.0
    %1306 = vmatprep.subr.mxu0 0.0
    %1307 = vmatpush1.msra.mxu0 0.0
    %1308 = vmatprep.subr.mxu0 0.0
    %1309 = vmatpush1.msra.mxu0 0.0
    %1310 = vmatprep.subr.mxu0 0.0
    %1311 = vmatpush1.msra.mxu0 0.0
    %1312 = vmatprep.subr.mxu0 0.0
    %1313 = vmatpush1.msra.mxu0 0.0
    %1314 = vmatprep.subr.mxu0 0.0
    %1315 = vmatpush1.msra.mxu0 0.0
    %1316 = vmatprep.subr.mxu0 0.0
    %1317 = vmatpush1.msra.mxu0 0.0
    %1318 = vmatprep.subr.mxu0 0.0
    %1319 = vmatpush1.msra.mxu0 0.0
    %1320 = vmatprep.subr.mxu0 0.0
    %1321 = vmatpush1.msra.mxu0 0.0
    %1322 = vmatprep.subr.mxu0 0.0
    %1323 = vmatpush1.msra.mxu0 0.0
    %1324 = vmatprep.subr.mxu0 0.0
    %1325 = vmatpush1.msra.mxu0 0.0
    %1326 = vmatprep.subr.mxu0 %v73
    %1327 = vmatpush1.msra.mxu0 %v72
    %1328 = vmatprep.subr.mxu0 %v69
    %1329 = vmatpush1.msra.mxu0 %v68
    %1330 = vmatprep.subr.mxu0 0.0
    %1331 = vmatpush2.msra.mxu0 0.0
    %1332 = vmatprep.subr.mxu0 0.0
    %1333 = vmatpush2.msra.mxu0 0.0
    %1334 = vmatprep.subr.mxu0 0.0
    %1335 = vmatpush2.msra.mxu0 0.0
    %1336 = vmatprep.subr.mxu0 0.0
    %1337 = vmatpush2.msra.mxu0 0.0
    %1338 = vmatprep.subr.mxu0 0.0
    %1339 = vmatpush2.msra.mxu0 0.0
    %1340 = vmatprep.subr.mxu0 0.0
    %1341 = vmatpush2.msra.mxu0 0.0
    %1342 = vmatprep.subr.mxu0 0.0
    %1343 = vmatpush2.msra.mxu0 0.0
    %1344 = vmatprep.subr.mxu0 0.0
    %1345 = vmatpush2.msra.mxu0 0.0
    %1346 = vmatprep.subr.mxu0 0.0
    %1347 = vmatpush2.msra.mxu0 0.0
    %1348 = vmatprep.subr.mxu0 0.0
    %1349 = vmatpush2.msra.mxu0 0.0
    %1350 = vmatprep.subr.mxu0 0.0
    %1351 = vmatpush2.msra.mxu0 0.0
    %1352 = vmatprep.subr.mxu0 0.0
    %1353 = vmatpush2.msra.mxu0 0.0
    %1354 = vmatprep.subr.mxu0 0.0
    %1355 = vmatpush2.msra.mxu0 0.0
    %1356 = vmatprep.subr.mxu0 0.0
    %1357 = vmatpush2.msra.mxu0 0.0
    %1358 = vmatprep.subr.mxu0 0.0
    %1359 = vmatpush2.msra.mxu0 0.0
    %1360 = vmatprep.subr.mxu0 0.0
    %1361 = vmatpush2.msra.mxu0 0.0
    %1362 = vmatprep.mubr.f32.mxu0 0.0
    %1363 = vmatmul.mubr.f32.gmra.mxu0 %v1225
    %v1364 = vpop.f32.mrf.mxu0
    %v1365 = vadd.f32 0.0, %v1364
    %v1366 = vpop.f32.mrf.mxu0
    %v1367 = vadd.f32 0.0, %v1366
    %1368 = vdwg.mxu0
    %v1373 = vrot.slane %v1294, 3
    %v1374 = vrot.slane %v1296, 3
    %v1375 = vrot.slane %v1365, 3
    %v1376 = vrot.slane %v1367, 3
    %v1381 = vadd.f32 %v184, %v1373
    %v1382 = vadd.f32 %v186, %v1374
    %v1383 = vadd.f32 %v255, %v1375
    %v1384 = vadd.f32 %v257, %v1376
    %v1385 = vxor.u32 %v1381, 2147483648
    %v1386 = vxor.u32 %v1382, 2147483648
    %v1387 = vxor.u32 %v1383, 2147483648
    %v1388 = vxor.u32 %v1384, 2147483648
    %v1389 = vmul.f32 %v1385, 1.442695
    %v1390 = vpow.pop %v1389
    %v1391 = vmul.f32 %v1386, 1.442695
    %v1392 = vpow.pop %v1391
    %v1393 = vmul.f32 %v1387, 1.442695
    %v1394 = vpow.pop %v1393
    %v1395 = vmul.f32 %v1388, 1.442695
    %v1396 = vpow.pop %v1395
    %v1397 = vadd.f32 %v1390, 1.0
    %v1398 = vadd.f32 %v1392, 1.0
    %v1399 = vadd.f32 %v1394, 1.0
    %v1400 = vadd.f32 %v1396, 1.0
    %v1401 = vrcp.pop %v1397
    %v1402 = vmul.f32 1.0, %v1401
    %v1403 = vrcp.pop %v1398
    %v1404 = vmul.f32 1.0, %v1403
    %v1405 = vrcp.pop %v1399
    %v1406 = vmul.f32 1.0, %v1405
    %v1407 = vrcp.pop %v1400
    %v1408 = vmul.f32 1.0, %v1407
    %v1409 = vmul.f32 %v1406, 2.0
    %v1410 = vsub.f32 %v1409, 1.0
    %v1412 = vrot.slane %v1220, 7
    %v1414 = vmul.f32 %v1404, %v1412
    %v1415 = vmul.f32 %v1402, %v1410
    %v1416 = vadd.f32 %v1414, %v1415
    %v1417 = vtanh.pop %v1416
    %v1418 = vmul.f32 %v1408, %v1417
    %v1420 = vrot.slane %v1418, 5
    %v1421 = vsel %vm259, %v1420, 0
    %1423 = vmatprep.subr.mxu0 0.0
    %1424 = vmatpush1.msra.mxu0 0.0
    %1425 = vmatprep.subr.mxu0 0.0
    %1426 = vmatpush1.msra.mxu0 0.0
    %1427 = vmatprep.subr.mxu0 0.0
    %1428 = vmatpush1.msra.mxu0 0.0
    %1429 = vmatprep.subr.mxu0 0.0
    %1430 = vmatpush1.msra.mxu0 0.0
    %1431 = vmatprep.subr.mxu0 0.0
    %1432 = vmatpush1.msra.mxu0 0.0
    %1433 = vmatprep.subr.mxu0 0.0
    %1434 = vmatpush1.msra.mxu0 0.0
    %1435 = vmatprep.subr.mxu0 0.0
    %1436 = vmatpush1.msra.mxu0 0.0
    %1437 = vmatprep.subr.mxu0 0.0
    %1438 = vmatpush1.msra.mxu0 0.0
    %1439 = vmatprep.subr.mxu0 0.0
    %1440 = vmatpush1.msra.mxu0 0.0
    %1441 = vmatprep.subr.mxu0 0.0
    %1442 = vmatpush1.msra.mxu0 0.0
    %1443 = vmatprep.subr.mxu0 0.0
    %1444 = vmatpush1.msra.mxu0 0.0
    %1445 = vmatprep.subr.mxu0 0.0
    %1446 = vmatpush1.msra.mxu0 0.0
    %1447 = vmatprep.subr.mxu0 0.0
    %1448 = vmatpush1.msra.mxu0 0.0
    %1449 = vmatprep.subr.mxu0 0.0
    %1450 = vmatpush1.msra.mxu0 0.0
    %1451 = vmatprep.subr.mxu0 %v71
    %1452 = vmatpush1.msra.mxu0 %v70
    %1453 = vmatprep.subr.mxu0 %v67
    %1454 = vmatpush1.msra.mxu0 %v66
    %1455 = vmatprep.subr.mxu0 0.0
    %1456 = vmatpush2.msra.mxu0 0.0
    %1457 = vmatprep.subr.mxu0 0.0
    %1458 = vmatpush2.msra.mxu0 0.0
    %1459 = vmatprep.subr.mxu0 0.0
    %1460 = vmatpush2.msra.mxu0 0.0
    %1461 = vmatprep.subr.mxu0 0.0
    %1462 = vmatpush2.msra.mxu0 0.0
    %1463 = vmatprep.subr.mxu0 0.0
    %1464 = vmatpush2.msra.mxu0 0.0
    %1465 = vmatprep.subr.mxu0 0.0
    %1466 = vmatpush2.msra.mxu0 0.0
    %1467 = vmatprep.subr.mxu0 0.0
    %1468 = vmatpush2.msra.mxu0 0.0
    %1469 = vmatprep.subr.mxu0 0.0
    %1470 = vmatpush2.msra.mxu0 0.0
    %1471 = vmatprep.subr.mxu0 0.0
    %1472 = vmatpush2.msra.mxu0 0.0
    %1473 = vmatprep.subr.mxu0 0.0
    %1474 = vmatpush2.msra.mxu0 0.0
    %1475 = vmatprep.subr.mxu0 0.0
    %1476 = vmatpush2.msra.mxu0 0.0
    %1477 = vmatprep.subr.mxu0 0.0
    %1478 = vmatpush2.msra.mxu0 0.0
    %1479 = vmatprep.subr.mxu0 0.0
    %1480 = vmatpush2.msra.mxu0 0.0
    %1481 = vmatprep.subr.mxu0 0.0
    %1482 = vmatpush2.msra.mxu0 0.0
    %1483 = vmatprep.subr.mxu0 0.0
    %1484 = vmatpush2.msra.mxu0 0.0
    %1485 = vmatprep.subr.mxu0 0.0
    %1486 = vmatpush2.msra.mxu0 0.0
    %1487 = vmatprep.mubr.f32.mxu0 0.0
    %1488 = vmatmul.mubr.f32.gmra.mxu0 %v1421
    %v1489 = vpop.f32.mrf.mxu0
    %v1490 = vadd.f32 0.0, %v1489
    %v1491 = vpop.f32.mrf.mxu0
    %v1492 = vadd.f32 0.0, %v1491
    %1493 = vdwg.mxu0
    %1494 = vmatprep.subr.mxu0 0.0
    %1495 = vmatpush1.msra.mxu0 0.0
    %1496 = vmatprep.subr.mxu0 0.0
    %1497 = vmatpush1.msra.mxu0 0.0
    %1498 = vmatprep.subr.mxu0 0.0
    %1499 = vmatpush1.msra.mxu0 0.0
    %1500 = vmatprep.subr.mxu0 0.0
    %1501 = vmatpush1.msra.mxu0 0.0
    %1502 = vmatprep.subr.mxu0 0.0
    %1503 = vmatpush1.msra.mxu0 0.0
    %1504 = vmatprep.subr.mxu0 0.0
    %1505 = vmatpush1.msra.mxu0 0.0
    %1506 = vmatprep.subr.mxu0 0.0
    %1507 = vmatpush1.msra.mxu0 0.0
    %1508 = vmatprep.subr.mxu0 0.0
    %1509 = vmatpush1.msra.mxu0 0.0
    %1510 = vmatprep.subr.mxu0 0.0
    %1511 = vmatpush1.msra.mxu0 0.0
    %1512 = vmatprep.subr.mxu0 0.0
    %1513 = vmatpush1.msra.mxu0 0.0
    %1514 = vmatprep.subr.mxu0 0.0
    %1515 = vmatpush1.msra.mxu0 0.0
    %1516 = vmatprep.subr.mxu0 0.0
    %1517 = vmatpush1.msra.mxu0 0.0
    %1518 = vmatprep.subr.mxu0 0.0
    %1519 = vmatpush1.msra.mxu0 0.0
    %1520 = vmatprep.subr.mxu0 0.0
    %1521 = vmatpush1.msra.mxu0 0.0
    %1522 = vmatprep.subr.mxu0 %v73
    %1523 = vmatpush1.msra.mxu0 %v72
    %1524 = vmatprep.subr.mxu0 %v69
    %1525 = vmatpush1.msra.mxu0 %v68
    %1526 = vmatprep.subr.mxu0 0.0
    %1527 = vmatpush2.msra.mxu0 0.0
    %1528 = vmatprep.subr.mxu0 0.0
    %1529 = vmatpush2.msra.mxu0 0.0
    %1530 = vmatprep.subr.mxu0 0.0
    %1531 = vmatpush2.msra.mxu0 0.0
    %1532 = vmatprep.subr.mxu0 0.0
    %1533 = vmatpush2.msra.mxu0 0.0
    %1534 = vmatprep.subr.mxu0 0.0
    %1535 = vmatpush2.msra.mxu0 0.0
    %1536 = vmatprep.subr.mxu0 0.0
    %1537 = vmatpush2.msra.mxu0 0.0
    %1538 = vmatprep.subr.mxu0 0.0
    %1539 = vmatpush2.msra.mxu0 0.0
    %1540 = vmatprep.subr.mxu0 0.0
    %1541 = vmatpush2.msra.mxu0 0.0
    %1542 = vmatprep.subr.mxu0 0.0
    %1543 = vmatpush2.msra.mxu0 0.0
    %1544 = vmatprep.subr.mxu0 0.0
    %1545 = vmatpush2.msra.mxu0 0.0
    %1546 = vmatprep.subr.mxu0 0.0
    %1547 = vmatpush2.msra.mxu0 0.0
    %1548 = vmatprep.subr.mxu0 0.0
    %1549 = vmatpush2.msra.mxu0 0.0
    %1550 = vmatprep.subr.mxu0 0.0
    %1551 = vmatpush2.msra.mxu0 0.0
    %1552 = vmatprep.subr.mxu0 0.0
    %1553 = vmatpush2.msra.mxu0 0.0
    %1554 = vmatprep.subr.mxu0 0.0
    %1555 = vmatpush2.msra.mxu0 0.0
    %1556 = vmatprep.subr.mxu0 0.0
    %1557 = vmatpush2.msra.mxu0 0.0
    %1558 = vmatprep.mubr.f32.mxu0 0.0
    %1559 = vmatmul.mubr.f32.gmra.mxu0 %v1421
    %v1560 = vpop.f32.mrf.mxu0
    %v1561 = vadd.f32 0.0, %v1560
    %v1562 = vpop.f32.mrf.mxu0
    %v1563 = vadd.f32 0.0, %v1562
    %1564 = vdwg.mxu0
    %v1569 = vrot.slane %v1490, 2
    %v1570 = vrot.slane %v1492, 2
    %v1571 = vrot.slane %v1561, 2
    %v1572 = vrot.slane %v1563, 2
    %v1577 = vadd.f32 %v184, %v1569
    %v1578 = vadd.f32 %v186, %v1570
    %v1579 = vadd.f32 %v255, %v1571
    %v1580 = vadd.f32 %v257, %v1572
    %v1581 = vxor.u32 %v1577, 2147483648
    %v1582 = vxor.u32 %v1578, 2147483648
    %v1583 = vxor.u32 %v1579, 2147483648
    %v1584 = vxor.u32 %v1580, 2147483648
    %v1585 = vmul.f32 %v1581, 1.442695
    %v1586 = vpow.pop %v1585
    %v1587 = vmul.f32 %v1582, 1.442695
    %v1588 = vpow.pop %v1587
    %v1589 = vmul.f32 %v1583, 1.442695
    %v1590 = vpow.pop %v1589
    %v1591 = vmul.f32 %v1584, 1.442695
    %v1592 = vpow.pop %v1591
    %v1593 = vadd.f32 %v1586, 1.0
    %v1594 = vadd.f32 %v1588, 1.0
    %v1595 = vadd.f32 %v1590, 1.0
    %v1596 = vadd.f32 %v1592, 1.0
    %v1597 = vrcp.pop %v1593
    %v1598 = vmul.f32 1.0, %v1597
    %v1599 = vrcp.pop %v1594
    %v1600 = vmul.f32 1.0, %v1599
    %v1601 = vrcp.pop %v1595
    %v1602 = vmul.f32 1.0, %v1601
    %v1603 = vrcp.pop %v1596
    %v1604 = vmul.f32 1.0, %v1603
    %v1605 = vmul.f32 %v1602, 2.0
    %v1606 = vsub.f32 %v1605, 1.0
    %v1608 = vrot.slane %v1416, 7
    %v1610 = vmul.f32 %v1600, %v1608
    %v1611 = vmul.f32 %v1598, %v1606
    %v1612 = vadd.f32 %v1610, %v1611
    %v1613 = vtanh.pop %v1612
    %v1614 = vmul.f32 %v1604, %v1613
    %v1616 = vrot.slane %v1614, 6
    %v1617 = vsel %vm259, %v1616, 0
    %1619 = vmatprep.subr.mxu0 0.0
    %1620 = vmatpush1.msra.mxu0 0.0
    %1621 = vmatprep.subr.mxu0 0.0
    %1622 = vmatpush1.msra.mxu0 0.0
    %1623 = vmatprep.subr.mxu0 0.0
    %1624 = vmatpush1.msra.mxu0 0.0
    %1625 = vmatprep.subr.mxu0 0.0
    %1626 = vmatpush1.msra.mxu0 0.0
    %1627 = vmatprep.subr.mxu0 0.0
    %1628 = vmatpush1.msra.mxu0 0.0
    %1629 = vmatprep.subr.mxu0 0.0
    %1630 = vmatpush1.msra.mxu0 0.0
    %1631 = vmatprep.subr.mxu0 0.0
    %1632 = vmatpush1.msra.mxu0 0.0
    %1633 = vmatprep.subr.mxu0 0.0
    %1634 = vmatpush1.msra.mxu0 0.0
    %1635 = vmatprep.subr.mxu0 0.0
    %1636 = vmatpush1.msra.mxu0 0.0
    %1637 = vmatprep.subr.mxu0 0.0
    %1638 = vmatpush1.msra.mxu0 0.0
    %1639 = vmatprep.subr.mxu0 0.0
    %1640 = vmatpush1.msra.mxu0 0.0
    %1641 = vmatprep.subr.mxu0 0.0
    %1642 = vmatpush1.msra.mxu0 0.0
    %1643 = vmatprep.subr.mxu0 0.0
    %1644 = vmatpush1.msra.mxu0 0.0
    %1645 = vmatprep.subr.mxu0 0.0
    %1646 = vmatpush1.msra.mxu0 0.0
    %1647 = vmatprep.subr.mxu0 %v71
    %1648 = vmatpush1.msra.mxu0 %v70
    %1649 = vmatprep.subr.mxu0 %v67
    %1650 = vmatpush1.msra.mxu0 %v66
    %1651 = vmatprep.subr.mxu0 0.0
    %1652 = vmatpush2.msra.mxu0 0.0
    %1653 = vmatprep.subr.mxu0 0.0
    %1654 = vmatpush2.msra.mxu0 0.0
    %1655 = vmatprep.subr.mxu0 0.0
    %1656 = vmatpush2.msra.mxu0 0.0
    %1657 = vmatprep.subr.mxu0 0.0
    %1658 = vmatpush2.msra.mxu0 0.0
    %1659 = vmatprep.subr.mxu0 0.0
    %1660 = vmatpush2.msra.mxu0 0.0
    %1661 = vmatprep.subr.mxu0 0.0
    %1662 = vmatpush2.msra.mxu0 0.0
    %1663 = vmatprep.subr.mxu0 0.0
    %1664 = vmatpush2.msra.mxu0 0.0
    %1665 = vmatprep.subr.mxu0 0.0
    %1666 = vmatpush2.msra.mxu0 0.0
    %1667 = vmatprep.subr.mxu0 0.0
    %1668 = vmatpush2.msra.mxu0 0.0
    %1669 = vmatprep.subr.mxu0 0.0
    %1670 = vmatpush2.msra.mxu0 0.0
    %1671 = vmatprep.subr.mxu0 0.0
    %1672 = vmatpush2.msra.mxu0 0.0
    %1673 = vmatprep.subr.mxu0 0.0
    %1674 = vmatpush2.msra.mxu0 0.0
    %1675 = vmatprep.subr.mxu0 0.0
    %1676 = vmatpush2.msra.mxu0 0.0
    %1677 = vmatprep.subr.mxu0 0.0
    %1678 = vmatpush2.msra.mxu0 0.0
    %1679 = vmatprep.subr.mxu0 0.0
    %1680 = vmatpush2.msra.mxu0 0.0
    %1681 = vmatprep.subr.mxu0 0.0
    %1682 = vmatpush2.msra.mxu0 0.0
    %1683 = vmatprep.mubr.f32.mxu0 0.0
    %1684 = vmatmul.mubr.f32.gmra.mxu0 %v1617
    %v1685 = vpop.f32.mrf.mxu0
    %v1686 = vadd.f32 0.0, %v1685
    %v1687 = vpop.f32.mrf.mxu0
    %v1688 = vadd.f32 0.0, %v1687
    %1689 = vdwg.mxu0
    %1690 = vmatprep.subr.mxu0 0.0
    %1691 = vmatpush1.msra.mxu0 0.0
    %1692 = vmatprep.subr.mxu0 0.0
    %1693 = vmatpush1.msra.mxu0 0.0
    %1694 = vmatprep.subr.mxu0 0.0
    %1695 = vmatpush1.msra.mxu0 0.0
    %1696 = vmatprep.subr.mxu0 0.0
    %1697 = vmatpush1.msra.mxu0 0.0
    %1698 = vmatprep.subr.mxu0 0.0
    %1699 = vmatpush1.msra.mxu0 0.0
    %1700 = vmatprep.subr.mxu0 0.0
    %1701 = vmatpush1.msra.mxu0 0.0
    %1702 = vmatprep.subr.mxu0 0.0
    %1703 = vmatpush1.msra.mxu0 0.0
    %1704 = vmatprep.subr.mxu0 0.0
    %1705 = vmatpush1.msra.mxu0 0.0
    %1706 = vmatprep.subr.mxu0 0.0
    %1707 = vmatpush1.msra.mxu0 0.0
    %1708 = vmatprep.subr.mxu0 0.0
    %1709 = vmatpush1.msra.mxu0 0.0
    %1710 = vmatprep.subr.mxu0 0.0
    %1711 = vmatpush1.msra.mxu0 0.0
    %1712 = vmatprep.subr.mxu0 0.0
    %1713 = vmatpush1.msra.mxu0 0.0
    %1714 = vmatprep.subr.mxu0 0.0
    %1715 = vmatpush1.msra.mxu0 0.0
    %1716 = vmatprep.subr.mxu0 0.0
    %1717 = vmatpush1.msra.mxu0 0.0
    %1718 = vmatprep.subr.mxu0 %v73
    %1719 = vmatpush1.msra.mxu0 %v72
    %1720 = vmatprep.subr.mxu0 %v69
    %1721 = vmatpush1.msra.mxu0 %v68
    %1722 = vmatprep.subr.mxu0 0.0
    %1723 = vmatpush2.msra.mxu0 0.0
    %1724 = vmatprep.subr.mxu0 0.0
    %1725 = vmatpush2.msra.mxu0 0.0
    %1726 = vmatprep.subr.mxu0 0.0
    %1727 = vmatpush2.msra.mxu0 0.0
    %1728 = vmatprep.subr.mxu0 0.0
    %1729 = vmatpush2.msra.mxu0 0.0
    %1730 = vmatprep.subr.mxu0 0.0
    %1731 = vmatpush2.msra.mxu0 0.0
    %1732 = vmatprep.subr.mxu0 0.0
    %1733 = vmatpush2.msra.mxu0 0.0
    %1734 = vmatprep.subr.mxu0 0.0
    %1735 = vmatpush2.msra.mxu0 0.0
    %1736 = vmatprep.subr.mxu0 0.0
    %1737 = vmatpush2.msra.mxu0 0.0
    %1738 = vmatprep.subr.mxu0 0.0
    %1739 = vmatpush2.msra.mxu0 0.0
    %1740 = vmatprep.subr.mxu0 0.0
    %1741 = vmatpush2.msra.mxu0 0.0
    %1742 = vmatprep.subr.mxu0 0.0
    %1743 = vmatpush2.msra.mxu0 0.0
    %1744 = vmatprep.subr.mxu0 0.0
    %1745 = vmatpush2.msra.mxu0 0.0
    %1746 = vmatprep.subr.mxu0 0.0
    %1747 = vmatpush2.msra.mxu0 0.0
    %1748 = vmatprep.subr.mxu0 0.0
    %1749 = vmatpush2.msra.mxu0 0.0
    %1750 = vmatprep.subr.mxu0 0.0
    %1751 = vmatpush2.msra.mxu0 0.0
    %1752 = vmatprep.subr.mxu0 0.0
    %1753 = vmatpush2.msra.mxu0 0.0
    %1754 = vmatprep.mubr.f32.mxu0 0.0
    %1755 = vmatmul.mubr.f32.gmra.mxu0 %v1617
    %v1756 = vpop.f32.mrf.mxu0
    %v1757 = vadd.f32 0.0, %v1756
    %v1758 = vpop.f32.mrf.mxu0
    %v1759 = vadd.f32 0.0, %v1758
    %1760 = vdwg.mxu0
    %v1765 = vrot.slane %v1686, 1
    %v1766 = vrot.slane %v1688, 1
    %v1767 = vrot.slane %v1757, 1
    %v1768 = vrot.slane %v1759, 1
    %v1773 = vadd.f32 %v184, %v1765
    %v1774 = vadd.f32 %v186, %v1766
    %v1775 = vadd.f32 %v255, %v1767
    %v1776 = vadd.f32 %v257, %v1768
    %v1777 = vxor.u32 %v1773, 2147483648
    %v1778 = vxor.u32 %v1774, 2147483648
    %v1779 = vxor.u32 %v1775, 2147483648
    %v1780 = vxor.u32 %v1776, 2147483648
    %v1781 = vmul.f32 %v1777, 1.442695
    %v1782 = vpow.pop %v1781
    %v1783 = vmul.f32 %v1778, 1.442695
    %v1784 = vpow.pop %v1783
    %v1785 = vmul.f32 %v1779, 1.442695
    %v1786 = vpow.pop %v1785
    %v1787 = vmul.f32 %v1780, 1.442695
    %v1788 = vpow.pop %v1787
    %v1789 = vadd.f32 %v1782, 1.0
    %v1790 = vadd.f32 %v1784, 1.0
    %v1791 = vadd.f32 %v1786, 1.0
    %v1792 = vadd.f32 %v1788, 1.0
    %v1793 = vrcp.pop %v1789
    %v1794 = vmul.f32 1.0, %v1793
    %v1795 = vrcp.pop %v1790
    %v1796 = vmul.f32 1.0, %v1795
    %v1797 = vrcp.pop %v1791
    %v1798 = vmul.f32 1.0, %v1797
    %v1799 = vrcp.pop %v1792
    %v1800 = vmul.f32 1.0, %v1799
    %v1801 = vmul.f32 %v1798, 2.0
    %v1802 = vsub.f32 %v1801, 1.0
    %v1804 = vrot.slane %v1612, 7
    %v1806 = vmul.f32 %v1796, %v1804
    %v1807 = vmul.f32 %v1794, %v1802
    %v1808 = vadd.f32 %v1806, %v1807
    %v1809 = vtanh.pop %v1808
    %v1810 = vmul.f32 %v1800, %v1809
    %v1811 = vld [vmem:[#allocation7 + $0x8] sm:$0xff]
    %v1812 = vld [vmem:[#allocation7 + $0x10] sm:$0xff]
    %v1813 = vld [vmem:[#allocation7 + $0x2] sm:$0x1]
    %v1815 = vrot.slane %v1810, 7
    %v1816 = vsel %vm259, %v1815, 0
    %1818 = vmatprep.subr.mxu0 0.0
    %1819 = vmatpush1.msra.mxu0 0.0
    %1820 = vmatprep.subr.mxu0 0.0
    %1821 = vmatpush1.msra.mxu0 0.0
    %1822 = vmatprep.subr.mxu0 0.0
    %1823 = vmatpush1.msra.mxu0 0.0
    %1824 = vmatprep.subr.mxu0 0.0
    %1825 = vmatpush1.msra.mxu0 0.0
    %1826 = vmatprep.subr.mxu0 0.0
    %1827 = vmatpush1.msra.mxu0 0.0
    %1828 = vmatprep.subr.mxu0 0.0
    %1829 = vmatpush1.msra.mxu0 0.0
    %1830 = vmatprep.subr.mxu0 0.0
    %1831 = vmatpush1.msra.mxu0 0.0
    %1832 = vmatprep.subr.mxu0 0.0
    %1833 = vmatpush1.msra.mxu0 0.0
    %1834 = vmatprep.subr.mxu0 0.0
    %1835 = vmatpush1.msra.mxu0 0.0
    %1836 = vmatprep.subr.mxu0 0.0
    %1837 = vmatpush1.msra.mxu0 0.0
    %1838 = vmatprep.subr.mxu0 0.0
    %1839 = vmatpush1.msra.mxu0 0.0
    %1840 = vmatprep.subr.mxu0 0.0
    %1841 = vmatpush1.msra.mxu0 0.0
    %1842 = vmatprep.subr.mxu0 0.0
    %1843 = vmatpush1.msra.mxu0 0.0
    %1844 = vmatprep.subr.mxu0 0.0
    %1845 = vmatpush1.msra.mxu0 0.0
    %1846 = vmatprep.subr.mxu0 0.0
    %1847 = vmatpush1.msra.mxu0 %v1812
    %1848 = vmatprep.subr.mxu0 0.0
    %1849 = vmatpush1.msra.mxu0 %v1811
    %1850 = vmatprep.subr.mxu0 0.0
    %1851 = vmatpush2.msra.mxu0 0.0
    %1852 = vmatprep.subr.mxu0 0.0
    %1853 = vmatpush2.msra.mxu0 0.0
    %1854 = vmatprep.subr.mxu0 0.0
    %1855 = vmatpush2.msra.mxu0 0.0
    %1856 = vmatprep.subr.mxu0 0.0
    %1857 = vmatpush2.msra.mxu0 0.0
    %1858 = vmatprep.subr.mxu0 0.0
    %1859 = vmatpush2.msra.mxu0 0.0
    %1860 = vmatprep.subr.mxu0 0.0
    %1861 = vmatpush2.msra.mxu0 0.0
    %1862 = vmatprep.subr.mxu0 0.0
    %1863 = vmatpush2.msra.mxu0 0.0
    %1864 = vmatprep.subr.mxu0 0.0
    %1865 = vmatpush2.msra.mxu0 0.0
    %1866 = vmatprep.subr.mxu0 0.0
    %1867 = vmatpush2.msra.mxu0 0.0
    %1868 = vmatprep.subr.mxu0 0.0
    %1869 = vmatpush2.msra.mxu0 0.0
    %1870 = vmatprep.subr.mxu0 0.0
    %1871 = vmatpush2.msra.mxu0 0.0
    %1872 = vmatprep.subr.mxu0 0.0
    %1873 = vmatpush2.msra.mxu0 0.0
    %1874 = vmatprep.subr.mxu0 0.0
    %1875 = vmatpush2.msra.mxu0 0.0
    %1876 = vmatprep.subr.mxu0 0.0
    %1877 = vmatpush2.msra.mxu0 0.0
    %1878 = vmatprep.subr.mxu0 0.0
    %1879 = vmatpush2.msra.mxu0 0.0
    %1880 = vmatprep.subr.mxu0 0.0
    %1881 = vmatpush2.msra.mxu0 0.0
    %1882 = vmatprep.mubr.f32.mxu0 0.0
    %1883 = vmatmul.mubr.f32.gmra.mxu0 %v1816
    %v1884 = vpop.f32.mrf.mxu0
    %v1885 = vadd.f32 %v1813, %v1884
    %v1886 = vpop.f32.mrf.mxu0
    %1887 = vdwg.mxu0
    %vm1888 = vcmask 0
    %1889 = vst.msk [vmem:[#allocation8] sm:$0x1] %vm1888, %v1885
    // Predicated region
    $region26: #{tpu_custom_call.1} parent=1 // pred_check
      _
    $region27: #{tpu_custom_call.1} parent=1 // pred_check_branch
      %1891 = sbr.rel (0) target = $region29
    $region28: #{tpu_custom_call.1} parent=1 // pred_region
      %s1893 = ssub.s32 16, 16
      %1894 = vsyncadd [#allocation4], %s1893
      %s1896 = sshll.u32 [#allocation8], 4
      %s1897 = int_to_ptr.vmem [resolvable:$true] %s1896
      %1899 = dma.vmem_to_hbm [thread:$0]  %s1897, 16, %s3, [#allocation4]
    $region29: #{tpu_custom_call.1} parent=1 // pred_fallthru
      _
    // Predicated region
    $region30: #{tpu_custom_call.1} parent=1 // pred_check
      _
    $region31: #{tpu_custom_call.1} parent=1 // pred_check_branch
      %1901 = sbr.rel (0) target = $region33
    $region32: #{tpu_custom_call.1} parent=1 // pred_region
      %1902 = dma.done [#allocation4], 16
    $region33: #{tpu_custom_call.1} parent=1 // pred_fallthru
      _
    %1903 = vsyncpa [#allocation3], 1
    %1904 = vsyncpa [#allocation6], 1
    %1905 = vsyncpa [#allocation4], 1

</llo_original>
